<compile_context>
chip_gen: v7x
topology: tpu7x:2x2x1
jax: 0.10.0
libtpu: 0.0.40
codegen_flags: <defaults>
</compile_context>

<pallas_src>
import jax
import jax.numpy as jnp
import numpy as np
from jax.experimental import pallas as pl
from jax.experimental.pallas import tpu as pltpu

DIM = 3
FC_STRUCT = [DIM, 20, 20, DIM]
LANE = 128
MAX_BATCH_TILE = 32768          # per-step VMEM at 32768: ~7 MB << scoped limit
STEP_OVERHEAD_ROWS = 4096       # ~0.35 us fixed per grid step, in row-equivalents

H1, H2 = FC_STRUCT[1], FC_STRUCT[2]
# Column layout of the packed weight operand (rows = 20):
_C_W1 = 0                       # [:, 0:3]    W1 folded with input scaling
_C_B1 = _C_W1 + DIM             # [:, 3:4]    b1 folded
_C_W2 = _C_B1 + 1               # [:, 4:24]   W2
_C_B2 = _C_W2 + H1              # [:, 24:25]  b2
_C_W3 = _C_B2 + 1               # [0:3, 25:45] W3 folded with output scaling
_C_B3 = _C_W3 + H2              # [0:3, 45:46] b3 folded
PACK_W = _C_B3 + 1              # 46


def net_map_kernel(x_ref,       # VMEM (3, BT)  feature-major input tile
                   p_ref,       # VMEM (20, 46) packed, scale-folded weights
                   o_ref):      # VMEM (3, BT)
    hp = jax.lax.Precision.HIGHEST
    x = x_ref[...]                                   # (3, BT)
    w1 = p_ref[:, _C_W1:_C_B1]                       # (20, 3)
    b1 = p_ref[:, _C_B1:_C_W2]                       # (20, 1)
    w2 = p_ref[:, _C_W2:_C_B2]                       # (20, 20)
    b2 = p_ref[:, _C_B2:_C_W3]                       # (20, 1)
    w3 = p_ref[0:DIM, _C_W3:_C_B3]                   # (3, 20)
    b3 = p_ref[0:DIM, _C_B3:PACK_W]                  # (3, 1)

    h1 = jnp.tanh(
        jnp.dot(w1, x, preferred_element_type=jnp.float32, precision=hp) + b1)
    h2 = jnp.tanh(
        jnp.dot(w2, h1, preferred_element_type=jnp.float32, precision=hp) + b2)
    o_ref[...] = (
        jnp.dot(w3, h2, preferred_element_type=jnp.float32, precision=hp) + b3)


def _num_tensorcores():
    """2 on v7x-class chips (2 TensorCores / megacore), else 1 (v5e/v6e)."""
    try:
        kind = jax.devices()[0].device_kind.lower()
    except Exception:
        return 1
    if "v7" in kind or "v4" in kind or "v5p" in kind:
        return 2
    return 1


def _choose_tiling(batch, max_tile=MAX_BATCH_TILE, n_cores=1):
    """Pick (tile, n_steps), tile a multiple of 128.

    Simple wall-clock model: each TensorCore runs ceil(steps / n_cores) grid
    steps, and a step costs its `tile` rows of work plus a fixed overhead of
    ~STEP_OVERHEAD_ROWS row-equivalents.  On 1-TC chips this collapses to
    "one big tile"; on 2-TC chips it prefers an even, balanced step count.
    """
    b_lane = pl.cdiv(batch, LANE) * LANE
    cap = max(LANE, min(max_tile, b_lane))
    best_cost, best_tile, best_steps = None, LANE, pl.cdiv(b_lane, LANE)
    for tile in range(LANE, cap + 1, LANE):
        steps = pl.cdiv(b_lane, tile)
        cost = pl.cdiv(steps, n_cores) * (tile + STEP_OVERHEAD_ROWS)
        if best_cost is None or cost < best_cost:
            best_cost, best_tile, best_steps = cost, tile, steps
    return best_tile, best_steps


def fold_and_pack(params, mu_xx, sig_xx, mu_yy, sig_yy):
    """Fold input/output affine scaling into W1/b1 and W3/b3 (host float64,
    vector-correct for per-feature mu/sig) and pack everything into a single
    (20, 46) float32 device array.  params: PyTorch convention W{i}:(out,in)."""
    w1 = np.asarray(params["W1"], np.float64)   # (20, 3)
    b1 = np.asarray(params["b1"], np.float64)   # (20,)
    w2 = np.asarray(params["W2"], np.float64)   # (20, 20)
    b2 = np.asarray(params["b2"], np.float64)   # (20,)
    w3 = np.asarray(params["W3"], np.float64)   # (3, 20)
    b3 = np.asarray(params["b3"], np.float64)   # (3,)

    mu_x = np.broadcast_to(np.asarray(mu_xx, np.float64), (DIM,))
    sig_x = np.broadcast_to(np.asarray(sig_xx, np.float64), (DIM,))
    mu_y = np.broadcast_to(np.asarray(mu_yy, np.float64), (DIM,))
    sig_y = np.broadcast_to(np.asarray(sig_yy, np.float64), (DIM,))

    w1f = w1 / sig_x[None, :]
    b1f = b1 - w1f @ mu_x
    w3f = sig_y[:, None] * w3
    b3f = sig_y * b3 + mu_y

    packed = np.zeros((H1, PACK_W), np.float64)
    packed[:, _C_W1:_C_B1] = w1f
    packed[:, _C_B1] = b1f
    packed[:, _C_W2:_C_B2] = w2
    packed[:, _C_B2] = b2
    packed[:DIM, _C_W3:_C_B3] = w3f
    packed[:DIM, _C_B3] = b3f
    return jnp.asarray(packed, jnp.float32)


def _pallas_forward_fm(xt, packed, tile, n_steps):
    """xt: (3, n_steps*tile) f32 feature-major -> (3, n_steps*tile) f32."""
    b_pad = n_steps * tile
    flops = 2 * sum(FC_STRUCT[i] * FC_STRUCT[i + 1]
                    for i in range(len(FC_STRUCT) - 1)) * b_pad
    transcendentals = (FC_STRUCT[1] + FC_STRUCT[2]) * b_pad
    bytes_accessed = 4 * (2 * DIM * b_pad + packed.size)

    return pl.pallas_call(
        net_map_kernel,
        out_shape=jax.ShapeDtypeStruct((DIM, b_pad), jnp.float32),
        grid_spec=pltpu.PrefetchScalarGridSpec(
            num_scalar_prefetch=0,
            grid=(n_steps,),
            in_specs=[
                pl.BlockSpec((DIM, tile), lambda i: (0, i)),      # x^T tile
                pl.BlockSpec(packed.shape, lambda i: (0, 0)),     # weights, resident
            ],
            out_specs=pl.BlockSpec((DIM, tile), lambda i: (0, i)),
        ),
        compiler_params=pltpu.CompilerParams(
            dimension_semantics=("parallel",),
        ),
        cost_estimate=pl.CostEstimate(
            flops=flops,
            transcendentals=transcendentals,
            bytes_accessed=bytes_accessed,
        ),
    )(xt, packed)


def make_net_map(params, mu_xx, sig_xx, mu_yy, sig_yy,
                 *, max_tile=MAX_BATCH_TILE, feature_major=False):
    """Fold + pack the weights once, and return a jitted forward.

    feature_major=False: forward(x) with x (B, 3) -> (B, 3)   (PyTorch layout)
    feature_major=True : forward(xt) with xt (3, B) -> (3, B) (no transposes)
    """
    packed = fold_and_pack(params, mu_xx, sig_xx, mu_yy, sig_yy)
    n_cores = _num_tensorcores()

    def fwd_fm(xt):
        batch = xt.shape[1]
        tile, n_steps = _choose_tiling(batch, max_tile, n_cores)
        b_pad = tile * n_steps
        x32 = xt.astype(jnp.float32)
        if b_pad != batch:
            x32 = jnp.pad(x32, ((0, 0), (0, b_pad - batch)))
        yt = _pallas_forward_fm(x32, packed, tile, n_steps)
        return yt[:, :batch]

    if feature_major:
        return jax.jit(fwd_fm)

    def fwd(x):
        return jnp.transpose(fwd_fm(jnp.transpose(x)))

    return jax.jit(fwd)


def init_params(key):
    """Deterministic init matching fc_struct = [3, 20, 20, 3].

    PyTorch Linear convention: W (out, in), b (out,), uniform(+-1/sqrt(fan_in)).
    """
    params = {}
    for idx in range(len(FC_STRUCT) - 1):
        fan_in, fan_out = FC_STRUCT[idx], FC_STRUCT[idx + 1]
        key, kw, kb = jax.random.split(key, 3)
        bound = 1.0 / float(np.sqrt(fan_in))
        params[f"W{idx + 1}"] = jax.random.uniform(
            kw, (fan_out, fan_in), jnp.float32, -bound, bound)
        params[f"b{idx + 1}"] = jax.random.uniform(
            kb, (fan_out,), jnp.float32, -bound, bound)
    return params


def net_map_ref(x, params, mu_xx, sig_xx, mu_yy, sig_yy):
    """Float64 host reference matching the unfolded PyTorch forward pass."""
    x = np.asarray(x, np.float64)
    w1 = np.asarray(params["W1"], np.float64)
    b1 = np.asarray(params["b1"], np.float64)
    w2 = np.asarray(params["W2"], np.float64)
    b2 = np.asarray(params["b2"], np.float64)
    w3 = np.asarray(params["W3"], np.float64)
    b3 = np.asarray(params["b3"], np.float64)

    h = (x - np.asarray(mu_xx, np.float64)) / np.asarray(sig_xx, np.float64)
    h = np.tanh(h @ w1.T + b1)
    h = np.tanh(h @ w2.T + b2)
    y = h @ w3.T + b3
    return y * np.asarray(sig_yy, np.float64) + np.asarray(mu_yy, np.float64)


if __name__ == "__main__":
    key = jax.random.PRNGKey(0)
    key, kx1, kx2 = jax.random.split(key, 3)

    # Scaling constants (module __init__ args)
    mu_xx, sig_xx = 0.1, 0.5
    mu_yy, sig_yy = -0.2, 2.0

    params = init_params(key)

    # Build once: folds scales + packs weights on host, returns a jitted forward.
    forward = make_net_map(params, mu_xx, sig_xx, mu_yy, sig_yy)

    # Small demo batch.
    B = 16
    x = jax.random.normal(kx1, (B, DIM), dtype=jnp.float32)
    out = jax.block_until_ready(forward(x))
    ref = net_map_ref(x, params, mu_xx, sig_xx, mu_yy, sig_yy)
    assert out.shape == (B, DIM)
    assert np.allclose(np.asarray(out), ref, atol=1e-4, rtol=1e-4), \
        "mismatch vs float64 reference (B=16)"

    # Ragged batch exercises the lane-padding / tiling path.
    B2 = 300
    x2 = jax.random.normal(kx2, (B2, DIM), dtype=jnp.float32)
    out2 = jax.block_until_ready(forward(x2))
    ref2 = net_map_ref(x2, params, mu_xx, sig_xx, mu_yy, sig_yy)
    assert out2.shape == (B2, DIM)
    assert np.allclose(np.asarray(out2), ref2, atol=1e-4, rtol=1e-4), \
        "mismatch vs float64 reference (B=300)"

    print("KERNEL_OK")
</pallas_src>

<mosaic_0001>
module attributes {stable_mosaic.version = 11 : i64} {
  func.func @net_map_kernel(%arg0: i32, %arg1: memref<3x128xf32, #tpu.memory_space<vmem>>, %arg2: memref<20x46xf32, #tpu.memory_space<vmem>>, %arg3: memref<3x128xf32, #tpu.memory_space<vmem>>) attributes {dimension_semantics = [#tpu.dimension_semantics<parallel>], iteration_bounds = array<i64: 1>, scalar_prefetch = 0 : i64, scratch_operands = 0 : i64, tpu.core_type = #tpu.core_type<tc>, window_params = [{transform_indices = @transform_0, window_bounds = array<i64: 3, 128>}, {pipeline_mode = #tpu.pipeline_mode<synchronous>, transform_indices = @transform_1, window_bounds = array<i64: 20, 46>}, {transform_indices = @transform_2, window_bounds = array<i64: 3, 128>}]} {
    %c0 = arith.constant 0 : index
    %c0_0 = arith.constant 0 : index
    %0 = vector.load %arg1[%c0, %c0_0] : memref<3x128xf32, #tpu.memory_space<vmem>>, vector<3x128xf32>
    %c0_1 = arith.constant 0 : index
    %c0_2 = arith.constant 0 : index
    %1 = vector.load %arg2[%c0_1, %c0_2] : memref<20x46xf32, #tpu.memory_space<vmem>>, vector<20x3xf32>
    %c0_3 = arith.constant 0 : index
    %c3 = arith.constant 3 : index
    %2 = vector.load %arg2[%c0_3, %c3] : memref<20x46xf32, #tpu.memory_space<vmem>>, vector<20x1xf32>
    %c0_4 = arith.constant 0 : index
    %c4 = arith.constant 4 : index
    %3 = vector.load %arg2[%c0_4, %c4] : memref<20x46xf32, #tpu.memory_space<vmem>>, vector<20x20xf32>
    %c0_5 = arith.constant 0 : index
    %c24 = arith.constant 24 : index
    %4 = vector.load %arg2[%c0_5, %c24] : memref<20x46xf32, #tpu.memory_space<vmem>>, vector<20x1xf32>
    %c0_6 = arith.constant 0 : index
    %c25 = arith.constant 25 : index
    %5 = vector.load %arg2[%c0_6, %c25] : memref<20x46xf32, #tpu.memory_space<vmem>>, vector<3x20xf32>
    %c0_7 = arith.constant 0 : index
    %c45 = arith.constant 45 : index
    %6 = vector.load %arg2[%c0_7, %c45] : memref<20x46xf32, #tpu.memory_space<vmem>>, vector<3x1xf32>
    %cst = arith.constant dense<0.000000e+00> : vector<20x128xf32>
    %7 = tpu.matmul %1, %0, %cst {dimension_numbers = #tpu.dot_dimension_numbers<[1], [0], [0], [1], [0, 0, 1, 1], [], []>, precision = #tpu.contract_precision<fp32>} : vector<20x3xf32>, vector<3x128xf32>, vector<20x128xf32> -> vector<20x128xf32>
    %8 = vector.broadcast %2 : vector<20x1xf32> to vector<20x128xf32>
    %9 = arith.addf %7, %8 : vector<20x128xf32>
    %10 = math.tanh %9 : vector<20x128xf32>
    %cst_8 = arith.constant dense<0.000000e+00> : vector<20x128xf32>
    %11 = tpu.matmul %3, %10, %cst_8 {dimension_numbers = #tpu.dot_dimension_numbers<[1], [0], [0], [1], [0, 0, 1, 1], [], []>, precision = #tpu.contract_precision<fp32>} : vector<20x20xf32>, vector<20x128xf32>, vector<20x128xf32> -> vector<20x128xf32>
    %12 = vector.broadcast %4 : vector<20x1xf32> to vector<20x128xf32>
    %13 = arith.addf %11, %12 : vector<20x128xf32>
    %14 = math.tanh %13 : vector<20x128xf32>
    %cst_9 = arith.constant dense<0.000000e+00> : vector<3x128xf32>
    %15 = tpu.matmul %5, %14, %cst_9 {dimension_numbers = #tpu.dot_dimension_numbers<[1], [0], [0], [1], [0, 0, 1, 1], [], []>, precision = #tpu.contract_precision<fp32>} : vector<3x20xf32>, vector<20x128xf32>, vector<3x128xf32> -> vector<3x128xf32>
    %16 = vector.broadcast %6 : vector<3x1xf32> to vector<3x128xf32>
    %17 = arith.addf %15, %16 : vector<3x128xf32>
    %c0_10 = arith.constant 0 : index
    %c0_11 = arith.constant 0 : index
    %18 = vector.load %arg3[%c0_10, %c0_11] : memref<3x128xf32, #tpu.memory_space<vmem>>, vector<3x128xf32>
    tpu.vector_store %arg3[%c0_10, %c0_11], %17 {strides = array<i32>} : memref<3x128xf32, #tpu.memory_space<vmem>>, vector<3x128xf32>,
    return
  }
  func.func @transform_0(%arg0: i32) -> (i32, i32) {
    %c0_i32 = arith.constant 0 : i32
    %c0_i32_0 = arith.constant 0 : i32
    return %c0_i32, %arg0 : i32, i32
  }
  func.func @transform_1(%arg0: i32) -> (i32, i32) {
    %c0_i32 = arith.constant 0 : i32
    %c0_i32_0 = arith.constant 0 : i32
    %c0_i32_1 = arith.constant 0 : i32
    return %c0_i32, %c0_i32_0 : i32, i32
  }
  func.func @transform_2(%arg0: i32) -> (i32, i32) {
    %c0_i32 = arith.constant 0 : i32
    %c0_i32_0 = arith.constant 0 : i32
    return %c0_i32, %arg0 : i32, i32
  }
}

</mosaic_0001>

<llo_original>
// kernel: fwd.1
$region0: #{fwd.1}
  #allocation0 [shape = 'u32[]', space=smem, size = 0x4, offset = 0x4, fixed_abs, tag = 'smem constant byte address 0x4 - core index']
  #allocation1 [shape = 'u32[144,128]{1,0:T(1,128)}', space=vmem, size = 0x12000, scoped, tag = 'internal scratch']
  %s0 = inlined_call_operand.vmem [shape: f32[3,128], index: 0, kind: input, shape index: {}]
  %s1 = inlined_call_operand.hbm [shape: f32[20,46], index: 1, kind: input, shape index: {}]
  %s2 = inlined_call_operand.vmem [shape: f32[3,128], index: 2, kind: output, shape index: {}]
  %s3 = sld [smem:[#allocation0]]
  $region22: #{fwd.1} parent=0
    _
  %s5 = ssub.s32 1, %s3
  %s6 = scalar_select 0, %s5, %s3
  $region1: #{fwd.1} parent=0
    #allocation2 [shape = 'u8[12288]{0}', space=vmem, size = 0x3000, scoped, tag = 'input window, operand 1, single buffered']
    #allocation3 [shape = 's32[1]{0}', space=sflag, size = 0x4, scoped, tag = 'scoped memory for fwd.1']
    %7 = vsyncpa [#allocation3], 0
    // Predicated region
    $region2: #{fwd.1} parent=1 // pred_check
      _
    $region3: #{fwd.1} parent=1 // pred_check_branch
      %9 = sbr.rel (0) target = $region5
    $region4: #{fwd.1} parent=1 // pred_region
      _
    $region5: #{fwd.1} parent=1 // pred_fallthru
      _
    // Predicated region
    $region6: #{fwd.1} parent=1 // pred_check
      _
    $region7: #{fwd.1} parent=1 // pred_check_branch
      %11 = sbr.rel (0) target = $region9
    $region8: #{fwd.1} parent=1 // pred_region
      %s13 = ssub.s32 384, 384
      %14 = vsyncadd [#allocation3], %s13
      %s15 = sshll.u32 [#allocation2], 4
      %s16 = int_to_ptr.vmem [resolvable:$true] %s15
      %21 = dma.hbm_to_vmem [thread:$0]  %s1, 384, %s16, [#allocation3], 128, 128, 8
    $region9: #{fwd.1} parent=1 // pred_fallthru
      _
    // Predicated region
    $region10: #{fwd.1} parent=1 // pred_check
      _
    $region11: #{fwd.1} parent=1 // pred_check_branch
      %23 = sbr.rel (0) target = $region13
    $region12: #{fwd.1} parent=1 // pred_region
      %24 = dma.done [#allocation3], 384
    $region13: #{fwd.1} parent=1 // pred_fallthru
      _
    %v25 = vld [vmem:[%s0] sm:$0x7]
    %v26 = vld [vmem:[#allocation2] sm:$0xff]
    %v27 = vld [vmem:[#allocation2 + $0x8] sm:$0xff]
    %v28 = vld [vmem:[#allocation2 + $0x10] sm:$0xf]
    %v29 = vld [vmem:[#allocation2] sm:$0x7]
    %31 = vset.pattern.permute.xlu0 3
    %32 = vperm.xlu0 %31, %v26
    %v33 = vpop.permute.xlu0 %32
    %36 = vset.pattern.permute.xlu0 3
    %37 = vperm.xlu0 %36, %v27
    %v38 = vpop.permute.xlu0 %37
    %41 = vset.pattern.permute.xlu0 3
    %42 = vperm.xlu0 %41, %v28
    %v43 = vpop.permute.xlu0 %42
    %vm45 = vcmask 23552
    %v46 = vsel %vm45, %v26, 0
    %v48 = vsel %vm45, %v27, 0
    %v50 = vsel %vm45, %v28, 0
    %vm52 = vcmask 1042432
    %v54 = vsel %vm52, %v25, 0
    %56 = vmatprep.subr.mxu0 0.0
    %v57 = vand.u32 %v54, 4294901760
    %58 = vmatpush1.msra.mxu0 %v57
    %59 = vmatprep.subr.mxu0 0.0
    %60 = vmatpush1.msra.mxu0 0.0
    %61 = vmatprep.subr.mxu0 0.0
    %62 = vmatpush1.msra.mxu0 0.0
    %63 = vmatprep.subr.mxu0 0.0
    %64 = vmatpush1.msra.mxu0 0.0
    %65 = vmatprep.subr.mxu0 0.0
    %66 = vmatpush1.msra.mxu0 0.0
    %67 = vmatprep.subr.mxu0 0.0
    %68 = vmatpush1.msra.mxu0 0.0
    %69 = vmatprep.subr.mxu0 0.0
    %70 = vmatpush1.msra.mxu0 0.0
    %71 = vmatprep.subr.mxu0 0.0
    %72 = vmatpush1.msra.mxu0 0.0
    %73 = vmatprep.subr.mxu0 0.0
    %74 = vmatpush1.msra.mxu0 0.0
    %75 = vmatprep.subr.mxu0 0.0
    %76 = vmatpush1.msra.mxu0 0.0
    %77 = vmatprep.subr.mxu0 0.0
    %78 = vmatpush1.msra.mxu0 0.0
    %79 = vmatprep.subr.mxu0 0.0
    %80 = vmatpush1.msra.mxu0 0.0
    %81 = vmatprep.subr.mxu0 0.0
    %82 = vmatpush1.msra.mxu0 0.0
    %83 = vmatprep.subr.mxu0 0.0
    %84 = vmatpush1.msra.mxu0 0.0
    %85 = vmatprep.subr.mxu0 0.0
    %86 = vmatpush1.msra.mxu0 0.0
    %87 = vmatprep.subr.mxu0 0.0
    %88 = vmatpush1.msra.mxu0 0.0
    %89 = vmatprep.subr.mxu0 0.0
    %90 = vmatpush1.msra.mxu0 0.0
    %91 = vmatprep.subr.mxu0 0.0
    %92 = vmatpush1.msra.mxu0 0.0
    %93 = vmatprep.subr.mxu0 0.0
    %94 = vmatpush1.msra.mxu0 0.0
    %95 = vmatprep.subr.mxu0 0.0
    %96 = vmatpush1.msra.mxu0 0.0
    %97 = vmatprep.subr.mxu0 0.0
    %98 = vmatpush1.msra.mxu0 0.0
    %99 = vmatprep.subr.mxu0 0.0
    %100 = vmatpush1.msra.mxu0 0.0
    %101 = vmatprep.subr.mxu0 0.0
    %102 = vmatpush1.msra.mxu0 0.0
    %103 = vmatprep.subr.mxu0 0.0
    %104 = vmatpush1.msra.mxu0 0.0
    %105 = vmatprep.subr.mxu0 0.0
    %106 = vmatpush1.msra.mxu0 0.0
    %107 = vmatprep.subr.mxu0 0.0
    %108 = vmatpush1.msra.mxu0 0.0
    %109 = vmatprep.subr.mxu0 0.0
    %110 = vmatpush1.msra.mxu0 0.0
    %111 = vmatprep.subr.mxu0 0.0
    %112 = vmatpush1.msra.mxu0 0.0
    %113 = vmatprep.subr.mxu0 0.0
    %114 = vmatpush1.msra.mxu0 0.0
    %115 = vmatprep.subr.mxu0 0.0
    %116 = vmatpush1.msra.mxu0 0.0
    %117 = vmatprep.subr.mxu0 0.0
    %118 = vmatpush1.msra.mxu0 0.0
    %119 = vmatprep.subr.mxu0 0.0
    %120 = vmatpush1.msra.mxu0 0.0
    %121 = vmatprep.mubr.f32.mxu0 0.0
    %v122 = vand.u32 %v46, 4294901760
    %v123 = vsub.f32 %v46, %v122
    %v124 = vand.u32 %v123, 4294901760
    %v125 = vsub.f32 %v123, %v124
    %v126 = vand.u32 %v125, 4294901760
    %127 = vmatmul.mubr.f32.gmra.mrb[0].mxu0 %v126
    %v128 = vpop.f32.mrb[0].mxu0
    %v129 = vadd.f32 %v33, %v128
    %v130 = vpop.f32.mrb[0].mxu0
    %131 = vmatprep.mubr.f32.mxu0 0.0
    %v132 = vand.u32 %v48, 4294901760
    %v133 = vsub.f32 %v48, %v132
    %v134 = vand.u32 %v133, 4294901760
    %v135 = vsub.f32 %v133, %v134
    %v136 = vand.u32 %v135, 4294901760
    %137 = vmatmul.mubr.f32.gmra.mrb[0].mxu0 %v136
    %v138 = vpop.f32.mrb[0].mxu0
    %v139 = vadd.f32 %v38, %v138
    %v140 = vpop.f32.mrb[0].mxu0
    %141 = vmatprep.mubr.f32.mxu0 0.0
    %v142 = vand.u32 %v50, 4294901760
    %v143 = vsub.f32 %v50, %v142
    %v144 = vand.u32 %v143, 4294901760
    %v145 = vsub.f32 %v143, %v144
    %v146 = vand.u32 %v145, 4294901760
    %147 = vmatmul.mubr.f32.gmra.mrb[0].mxu0 %v146
    %v148 = vpop.f32.mrb[0].mxu0
    %v149 = vadd.f32 %v43, %v148
    %v150 = vpop.f32.mrb[0].mxu0
    %151 = vdwg.mxu0
    %152 = vmatprep.subr.mxu0 0.0
    %v153 = vand.u32 %v54, 4294901760
    %v154 = vsub.f32 %v54, %v153
    %v155 = vand.u32 %v154, 4294901760
    %v156 = vsub.f32 %v154, %v155
    %v157 = vand.u32 %v156, 4294901760
    %158 = vmatpush1.msra.mxu0 %v157
    %159 = vmatprep.subr.mxu0 0.0
    %160 = vmatpush1.msra.mxu0 0.0
    %161 = vmatprep.subr.mxu0 0.0
    %162 = vmatpush1.msra.mxu0 0.0
    %163 = vmatprep.subr.mxu0 0.0
    %164 = vmatpush1.msra.mxu0 0.0
    %165 = vmatprep.subr.mxu0 0.0
    %166 = vmatpush1.msra.mxu0 0.0
    %167 = vmatprep.subr.mxu0 0.0
    %168 = vmatpush1.msra.mxu0 0.0
    %169 = vmatprep.subr.mxu0 0.0
    %170 = vmatpush1.msra.mxu0 0.0
    %171 = vmatprep.subr.mxu0 0.0
    %172 = vmatpush1.msra.mxu0 0.0
    %173 = vmatprep.subr.mxu0 0.0
    %174 = vmatpush1.msra.mxu0 0.0
    %175 = vmatprep.subr.mxu0 0.0
    %176 = vmatpush1.msra.mxu0 0.0
    %177 = vmatprep.subr.mxu0 0.0
    %178 = vmatpush1.msra.mxu0 0.0
    %179 = vmatprep.subr.mxu0 0.0
    %180 = vmatpush1.msra.mxu0 0.0
    %181 = vmatprep.subr.mxu0 0.0
    %182 = vmatpush1.msra.mxu0 0.0
    %183 = vmatprep.subr.mxu0 0.0
    %184 = vmatpush1.msra.mxu0 0.0
    %185 = vmatprep.subr.mxu0 0.0
    %186 = vmatpush1.msra.mxu0 0.0
    %187 = vmatprep.subr.mxu0 0.0
    %188 = vmatpush1.msra.mxu0 0.0
    %189 = vmatprep.subr.mxu0 0.0
    %190 = vmatpush1.msra.mxu0 0.0
    %191 = vmatprep.subr.mxu0 0.0
    %192 = vmatpush1.msra.mxu0 0.0
    %193 = vmatprep.subr.mxu0 0.0
    %194 = vmatpush1.msra.mxu0 0.0
    %195 = vmatprep.subr.mxu0 0.0
    %196 = vmatpush1.msra.mxu0 0.0
    %197 = vmatprep.subr.mxu0 0.0
    %198 = vmatpush1.msra.mxu0 0.0
    %199 = vmatprep.subr.mxu0 0.0
    %200 = vmatpush1.msra.mxu0 0.0
    %201 = vmatprep.subr.mxu0 0.0
    %202 = vmatpush1.msra.mxu0 0.0
    %203 = vmatprep.subr.mxu0 0.0
    %204 = vmatpush1.msra.mxu0 0.0
    %205 = vmatprep.subr.mxu0 0.0
    %206 = vmatpush1.msra.mxu0 0.0
    %207 = vmatprep.subr.mxu0 0.0
    %208 = vmatpush1.msra.mxu0 0.0
    %209 = vmatprep.subr.mxu0 0.0
    %210 = vmatpush1.msra.mxu0 0.0
    %211 = vmatprep.subr.mxu0 0.0
    %212 = vmatpush1.msra.mxu0 0.0
    %213 = vmatprep.subr.mxu0 0.0
    %214 = vmatpush1.msra.mxu0 0.0
    %215 = vmatprep.subr.mxu0 0.0
    %216 = vmatpush1.msra.mxu0 0.0
    %217 = vmatprep.subr.mxu0 0.0
    %218 = vmatpush1.msra.mxu0 0.0
    %219 = vmatprep.subr.mxu0 0.0
    %220 = vmatpush1.msra.mxu0 0.0
    %221 = vmatprep.mubr.f32.mxu0 0.0
    %v222 = vand.u32 %v46, 4294901760
    %223 = vmatmul.mubr.f32.gmra.mrb[0].mxu0 %v222
    %v224 = vpop.f32.mrb[0].mxu0
    %v225 = vadd.f32 %v129, %v224
    %v226 = vpop.f32.mrb[0].mxu0
    %227 = vmatprep.mubr.f32.mxu0 0.0
    %v228 = vand.u32 %v48, 4294901760
    %229 = vmatmul.mubr.f32.gmra.mrb[0].mxu0 %v228
    %v230 = vpop.f32.mrb[0].mxu0
    %v231 = vadd.f32 %v139, %v230
    %v232 = vpop.f32.mrb[0].mxu0
    %233 = vmatprep.mubr.f32.mxu0 0.0
    %v234 = vand.u32 %v50, 4294901760
    %235 = vmatmul.mubr.f32.gmra.mrb[0].mxu0 %v234
    %v236 = vpop.f32.mrb[0].mxu0
    %v237 = vadd.f32 %v149, %v236
    %v238 = vpop.f32.mrb[0].mxu0
    %239 = vdwg.mxu0
    %240 = vmatprep.subr.mxu0 0.0
    %v241 = vand.u32 %v54, 4294901760
    %v242 = vsub.f32 %v54, %v241
    %243 = vmatpush1.msra.mxu0 %v242
    %244 = vmatprep.subr.mxu0 0.0
    %245 = vmatpush1.msra.mxu0 0.0
    %246 = vmatprep.subr.mxu0 0.0
    %247 = vmatpush1.msra.mxu0 0.0
    %248 = vmatprep.subr.mxu0 0.0
    %249 = vmatpush1.msra.mxu0 0.0
    %250 = vmatprep.subr.mxu0 0.0
    %251 = vmatpush1.msra.mxu0 0.0
    %252 = vmatprep.subr.mxu0 0.0
    %253 = vmatpush1.msra.mxu0 0.0
    %254 = vmatprep.subr.mxu0 0.0
    %255 = vmatpush1.msra.mxu0 0.0
    %256 = vmatprep.subr.mxu0 0.0
    %257 = vmatpush1.msra.mxu0 0.0
    %258 = vmatprep.subr.mxu0 0.0
    %259 = vmatpush1.msra.mxu0 0.0
    %260 = vmatprep.subr.mxu0 0.0
    %261 = vmatpush1.msra.mxu0 0.0
    %262 = vmatprep.subr.mxu0 0.0
    %263 = vmatpush1.msra.mxu0 0.0
    %264 = vmatprep.subr.mxu0 0.0
    %265 = vmatpush1.msra.mxu0 0.0
    %266 = vmatprep.subr.mxu0 0.0
    %267 = vmatpush1.msra.mxu0 0.0
    %268 = vmatprep.subr.mxu0 0.0
    %269 = vmatpush1.msra.mxu0 0.0
    %270 = vmatprep.subr.mxu0 0.0
    %271 = vmatpush1.msra.mxu0 0.0
    %272 = vmatprep.subr.mxu0 0.0
    %273 = vmatpush1.msra.mxu0 0.0
    %274 = vmatprep.subr.mxu0 0.0
    %275 = vmatpush1.msra.mxu0 0.0
    %276 = vmatprep.subr.mxu0 0.0
    %277 = vmatpush1.msra.mxu0 0.0
    %278 = vmatprep.subr.mxu0 0.0
    %279 = vmatpush1.msra.mxu0 0.0
    %280 = vmatprep.subr.mxu0 0.0
    %281 = vmatpush1.msra.mxu0 0.0
    %282 = vmatprep.subr.mxu0 0.0
    %283 = vmatpush1.msra.mxu0 0.0
    %284 = vmatprep.subr.mxu0 0.0
    %285 = vmatpush1.msra.mxu0 0.0
    %286 = vmatprep.subr.mxu0 0.0
    %287 = vmatpush1.msra.mxu0 0.0
    %288 = vmatprep.subr.mxu0 0.0
    %289 = vmatpush1.msra.mxu0 0.0
    %290 = vmatprep.subr.mxu0 0.0
    %291 = vmatpush1.msra.mxu0 0.0
    %292 = vmatprep.subr.mxu0 0.0
    %293 = vmatpush1.msra.mxu0 0.0
    %294 = vmatprep.subr.mxu0 0.0
    %295 = vmatpush1.msra.mxu0 0.0
    %296 = vmatprep.subr.mxu0 0.0
    %297 = vmatpush1.msra.mxu0 0.0
    %298 = vmatprep.subr.mxu0 0.0
    %299 = vmatpush1.msra.mxu0 0.0
    %300 = vmatprep.subr.mxu0 0.0
    %301 = vmatpush1.msra.mxu0 0.0
    %302 = vmatprep.subr.mxu0 0.0
    %303 = vmatpush1.msra.mxu0 0.0
    %304 = vmatprep.subr.mxu0 0.0
    %305 = vmatpush1.msra.mxu0 0.0
    %306 = vmatprep.mubr.f32.mxu0 0.0
    %v307 = vand.u32 %v46, 4294901760
    %v308 = vsub.f32 %v46, %v307
    %309 = vmatmul.mubr.f32.gmra.mrb[0].mxu0 %v308
    %v310 = vpop.f32.mrb[0].mxu0
    %v311 = vadd.f32 %v225, %v310
    %v312 = vpop.f32.mrb[0].mxu0
    %313 = vmatprep.mubr.f32.mxu0 0.0
    %v314 = vand.u32 %v48, 4294901760
    %v315 = vsub.f32 %v48, %v314
    %316 = vmatmul.mubr.f32.gmra.mrb[0].mxu0 %v315
    %v317 = vpop.f32.mrb[0].mxu0
    %v318 = vadd.f32 %v231, %v317
    %v319 = vpop.f32.mrb[0].mxu0
    %320 = vmatprep.mubr.f32.mxu0 0.0
    %v321 = vand.u32 %v50, 4294901760
    %v322 = vsub.f32 %v50, %v321
    %323 = vmatmul.mubr.f32.gmra.mrb[0].mxu0 %v322
    %v324 = vpop.f32.mrb[0].mxu0
    %v325 = vadd.f32 %v237, %v324
    %v326 = vpop.f32.mrb[0].mxu0
    %327 = vdwg.mxu0
    %328 = vmatprep.subr.mxu0 0.0
    %v329 = vand.u32 %v54, 4294901760
    %330 = vmatpush1.msra.mxu0 %v329
    %331 = vmatprep.subr.mxu0 0.0
    %332 = vmatpush1.msra.mxu0 0.0
    %333 = vmatprep.subr.mxu0 0.0
    %334 = vmatpush1.msra.mxu0 0.0
    %335 = vmatprep.subr.mxu0 0.0
    %336 = vmatpush1.msra.mxu0 0.0
    %337 = vmatprep.subr.mxu0 0.0
    %338 = vmatpush1.msra.mxu0 0.0
    %339 = vmatprep.subr.mxu0 0.0
    %340 = vmatpush1.msra.mxu0 0.0
    %341 = vmatprep.subr.mxu0 0.0
    %342 = vmatpush1.msra.mxu0 0.0
    %343 = vmatprep.subr.mxu0 0.0
    %344 = vmatpush1.msra.mxu0 0.0
    %345 = vmatprep.subr.mxu0 0.0
    %346 = vmatpush1.msra.mxu0 0.0
    %347 = vmatprep.subr.mxu0 0.0
    %348 = vmatpush1.msra.mxu0 0.0
    %349 = vmatprep.subr.mxu0 0.0
    %350 = vmatpush1.msra.mxu0 0.0
    %351 = vmatprep.subr.mxu0 0.0
    %352 = vmatpush1.msra.mxu0 0.0
    %353 = vmatprep.subr.mxu0 0.0
    %354 = vmatpush1.msra.mxu0 0.0
    %355 = vmatprep.subr.mxu0 0.0
    %356 = vmatpush1.msra.mxu0 0.0
    %357 = vmatprep.subr.mxu0 0.0
    %358 = vmatpush1.msra.mxu0 0.0
    %359 = vmatprep.subr.mxu0 0.0
    %360 = vmatpush1.msra.mxu0 0.0
    %361 = vmatprep.subr.mxu0 0.0
    %362 = vmatpush1.msra.mxu0 0.0
    %363 = vmatprep.subr.mxu0 0.0
    %364 = vmatpush1.msra.mxu0 0.0
    %365 = vmatprep.subr.mxu0 0.0
    %366 = vmatpush1.msra.mxu0 0.0
    %367 = vmatprep.subr.mxu0 0.0
    %368 = vmatpush1.msra.mxu0 0.0
    %369 = vmatprep.subr.mxu0 0.0
    %370 = vmatpush1.msra.mxu0 0.0
    %371 = vmatprep.subr.mxu0 0.0
    %372 = vmatpush1.msra.mxu0 0.0
    %373 = vmatprep.subr.mxu0 0.0
    %374 = vmatpush1.msra.mxu0 0.0
    %375 = vmatprep.subr.mxu0 0.0
    %376 = vmatpush1.msra.mxu0 0.0
    %377 = vmatprep.subr.mxu0 0.0
    %378 = vmatpush1.msra.mxu0 0.0
    %379 = vmatprep.subr.mxu0 0.0
    %380 = vmatpush1.msra.mxu0 0.0
    %381 = vmatprep.subr.mxu0 0.0
    %382 = vmatpush1.msra.mxu0 0.0
    %383 = vmatprep.subr.mxu0 0.0
    %384 = vmatpush1.msra.mxu0 0.0
    %385 = vmatprep.subr.mxu0 0.0
    %386 = vmatpush1.msra.mxu0 0.0
    %387 = vmatprep.subr.mxu0 0.0
    %388 = vmatpush1.msra.mxu0 0.0
    %389 = vmatprep.subr.mxu0 0.0
    %390 = vmatpush1.msra.mxu0 0.0
    %391 = vmatprep.subr.mxu0 0.0
    %392 = vmatpush1.msra.mxu0 0.0
    %393 = vmatprep.mubr.f32.mxu0 0.0
    %v394 = vand.u32 %v46, 4294901760
    %v395 = vsub.f32 %v46, %v394
    %v396 = vand.u32 %v395, 4294901760
    %397 = vmatmul.mubr.f32.gmra.mrb[0].mxu0 %v396
    %v398 = vpop.f32.mrb[0].mxu0
    %v399 = vadd.f32 %v311, %v398
    %v400 = vpop.f32.mrb[0].mxu0
    %401 = vmatprep.mubr.f32.mxu0 0.0
    %v402 = vand.u32 %v48, 4294901760
    %v403 = vsub.f32 %v48, %v402
    %v404 = vand.u32 %v403, 4294901760
    %405 = vmatmul.mubr.f32.gmra.mrb[0].mxu0 %v404
    %v406 = vpop.f32.mrb[0].mxu0
    %v407 = vadd.f32 %v318, %v406
    %v408 = vpop.f32.mrb[0].mxu0
    %409 = vmatprep.mubr.f32.mxu0 0.0
    %v410 = vand.u32 %v50, 4294901760
    %v411 = vsub.f32 %v50, %v410
    %v412 = vand.u32 %v411, 4294901760
    %413 = vmatmul.mubr.f32.gmra.mrb[0].mxu0 %v412
    %v414 = vpop.f32.mrb[0].mxu0
    %v415 = vadd.f32 %v325, %v414
    %v416 = vpop.f32.mrb[0].mxu0
    %417 = vdwg.mxu0
    %418 = vmatprep.subr.mxu0 0.0
    %v419 = vand.u32 %v54, 4294901760
    %v420 = vsub.f32 %v54, %v419
    %v421 = vand.u32 %v420, 4294901760
    %422 = vmatpush1.msra.mxu0 %v421
    %423 = vmatprep.subr.mxu0 0.0
    %424 = vmatpush1.msra.mxu0 0.0
    %425 = vmatprep.subr.mxu0 0.0
    %426 = vmatpush1.msra.mxu0 0.0
    %427 = vmatprep.subr.mxu0 0.0
    %428 = vmatpush1.msra.mxu0 0.0
    %429 = vmatprep.subr.mxu0 0.0
    %430 = vmatpush1.msra.mxu0 0.0
    %431 = vmatprep.subr.mxu0 0.0
    %432 = vmatpush1.msra.mxu0 0.0
    %433 = vmatprep.subr.mxu0 0.0
    %434 = vmatpush1.msra.mxu0 0.0
    %435 = vmatprep.subr.mxu0 0.0
    %436 = vmatpush1.msra.mxu0 0.0
    %437 = vmatprep.subr.mxu0 0.0
    %438 = vmatpush1.msra.mxu0 0.0
    %439 = vmatprep.subr.mxu0 0.0
    %440 = vmatpush1.msra.mxu0 0.0
    %441 = vmatprep.subr.mxu0 0.0
    %442 = vmatpush1.msra.mxu0 0.0
    %443 = vmatprep.subr.mxu0 0.0
    %444 = vmatpush1.msra.mxu0 0.0
    %445 = vmatprep.subr.mxu0 0.0
    %446 = vmatpush1.msra.mxu0 0.0
    %447 = vmatprep.subr.mxu0 0.0
    %448 = vmatpush1.msra.mxu0 0.0
    %449 = vmatprep.subr.mxu0 0.0
    %450 = vmatpush1.msra.mxu0 0.0
    %451 = vmatprep.subr.mxu0 0.0
    %452 = vmatpush1.msra.mxu0 0.0
    %453 = vmatprep.subr.mxu0 0.0
    %454 = vmatpush1.msra.mxu0 0.0
    %455 = vmatprep.subr.mxu0 0.0
    %456 = vmatpush1.msra.mxu0 0.0
    %457 = vmatprep.subr.mxu0 0.0
    %458 = vmatpush1.msra.mxu0 0.0
    %459 = vmatprep.subr.mxu0 0.0
    %460 = vmatpush1.msra.mxu0 0.0
    %461 = vmatprep.subr.mxu0 0.0
    %462 = vmatpush1.msra.mxu0 0.0
    %463 = vmatprep.subr.mxu0 0.0
    %464 = vmatpush1.msra.mxu0 0.0
    %465 = vmatprep.subr.mxu0 0.0
    %466 = vmatpush1.msra.mxu0 0.0
    %467 = vmatprep.subr.mxu0 0.0
    %468 = vmatpush1.msra.mxu0 0.0
    %469 = vmatprep.subr.mxu0 0.0
    %470 = vmatpush1.msra.mxu0 0.0
    %471 = vmatprep.subr.mxu0 0.0
    %472 = vmatpush1.msra.mxu0 0.0
    %473 = vmatprep.subr.mxu0 0.0
    %474 = vmatpush1.msra.mxu0 0.0
    %475 = vmatprep.subr.mxu0 0.0
    %476 = vmatpush1.msra.mxu0 0.0
    %477 = vmatprep.subr.mxu0 0.0
    %478 = vmatpush1.msra.mxu0 0.0
    %479 = vmatprep.subr.mxu0 0.0
    %480 = vmatpush1.msra.mxu0 0.0
    %481 = vmatprep.subr.mxu0 0.0
    %482 = vmatpush1.msra.mxu0 0.0
    %483 = vmatprep.subr.mxu0 0.0
    %484 = vmatpush1.msra.mxu0 0.0
    %485 = vmatprep.mubr.f32.mxu0 0.0
    %v486 = vand.u32 %v46, 4294901760
    %487 = vmatmul.mubr.f32.gmra.mrb[0].mxu0 %v486
    %v488 = vpop.f32.mrb[0].mxu0
    %v489 = vadd.f32 %v399, %v488
    %v490 = vpop.f32.mrb[0].mxu0
    %491 = vmatprep.mubr.f32.mxu0 0.0
    %v492 = vand.u32 %v48, 4294901760
    %493 = vmatmul.mubr.f32.gmra.mrb[0].mxu0 %v492
    %v494 = vpop.f32.mrb[0].mxu0
    %v495 = vadd.f32 %v407, %v494
    %v496 = vpop.f32.mrb[0].mxu0
    %497 = vmatprep.mubr.f32.mxu0 0.0
    %v498 = vand.u32 %v50, 4294901760
    %499 = vmatmul.mubr.f32.gmra.mrb[0].mxu0 %v498
    %v500 = vpop.f32.mrb[0].mxu0
    %v501 = vadd.f32 %v415, %v500
    %v502 = vpop.f32.mrb[0].mxu0
    %503 = vdwg.mxu0
    %504 = vmatprep.subr.mxu0 0.0
    %v505 = vand.u32 %v54, 4294901760
    %506 = vmatpush1.msra.mxu0 %v505
    %507 = vmatprep.subr.mxu0 0.0
    %508 = vmatpush1.msra.mxu0 0.0
    %509 = vmatprep.subr.mxu0 0.0
    %510 = vmatpush1.msra.mxu0 0.0
    %511 = vmatprep.subr.mxu0 0.0
    %512 = vmatpush1.msra.mxu0 0.0
    %513 = vmatprep.subr.mxu0 0.0
    %514 = vmatpush1.msra.mxu0 0.0
    %515 = vmatprep.subr.mxu0 0.0
    %516 = vmatpush1.msra.mxu0 0.0
    %517 = vmatprep.subr.mxu0 0.0
    %518 = vmatpush1.msra.mxu0 0.0
    %519 = vmatprep.subr.mxu0 0.0
    %520 = vmatpush1.msra.mxu0 0.0
    %521 = vmatprep.subr.mxu0 0.0
    %522 = vmatpush1.msra.mxu0 0.0
    %523 = vmatprep.subr.mxu0 0.0
    %524 = vmatpush1.msra.mxu0 0.0
    %525 = vmatprep.subr.mxu0 0.0
    %526 = vmatpush1.msra.mxu0 0.0
    %527 = vmatprep.subr.mxu0 0.0
    %528 = vmatpush1.msra.mxu0 0.0
    %529 = vmatprep.subr.mxu0 0.0
    %530 = vmatpush1.msra.mxu0 0.0
    %531 = vmatprep.subr.mxu0 0.0
    %532 = vmatpush1.msra.mxu0 0.0
    %533 = vmatprep.subr.mxu0 0.0
    %534 = vmatpush1.msra.mxu0 0.0
    %535 = vmatprep.subr.mxu0 0.0
    %536 = vmatpush1.msra.mxu0 0.0
    %537 = vmatprep.subr.mxu0 0.0
    %538 = vmatpush1.msra.mxu0 0.0
    %539 = vmatprep.subr.mxu0 0.0
    %540 = vmatpush1.msra.mxu0 0.0
    %541 = vmatprep.subr.mxu0 0.0
    %542 = vmatpush1.msra.mxu0 0.0
    %543 = vmatprep.subr.mxu0 0.0
    %544 = vmatpush1.msra.mxu0 0.0
    %545 = vmatprep.subr.mxu0 0.0
    %546 = vmatpush1.msra.mxu0 0.0
    %547 = vmatprep.subr.mxu0 0.0
    %548 = vmatpush1.msra.mxu0 0.0
    %549 = vmatprep.subr.mxu0 0.0
    %550 = vmatpush1.msra.mxu0 0.0
    %551 = vmatprep.subr.mxu0 0.0
    %552 = vmatpush1.msra.mxu0 0.0
    %553 = vmatprep.subr.mxu0 0.0
    %554 = vmatpush1.msra.mxu0 0.0
    %555 = vmatprep.subr.mxu0 0.0
    %556 = vmatpush1.msra.mxu0 0.0
    %557 = vmatprep.subr.mxu0 0.0
    %558 = vmatpush1.msra.mxu0 0.0
    %559 = vmatprep.subr.mxu0 0.0
    %560 = vmatpush1.msra.mxu0 0.0
    %561 = vmatprep.subr.mxu0 0.0
    %562 = vmatpush1.msra.mxu0 0.0
    %563 = vmatprep.subr.mxu0 0.0
    %564 = vmatpush1.msra.mxu0 0.0
    %565 = vmatprep.subr.mxu0 0.0
    %566 = vmatpush1.msra.mxu0 0.0
    %567 = vmatprep.subr.mxu0 0.0
    %568 = vmatpush1.msra.mxu0 0.0
    %569 = vmatprep.mubr.f32.mxu0 0.0
    %v570 = vand.u32 %v46, 4294901760
    %571 = vmatmul.mubr.f32.gmra.mrb[0].mxu0 %v570
    %v572 = vpop.f32.mrb[0].mxu0
    %v573 = vadd.f32 %v489, %v572
    %v574 = vpop.f32.mrb[0].mxu0
    %575 = vmatprep.mubr.f32.mxu0 0.0
    %v576 = vand.u32 %v48, 4294901760
    %577 = vmatmul.mubr.f32.gmra.mrb[0].mxu0 %v576
    %v578 = vpop.f32.mrb[0].mxu0
    %v579 = vadd.f32 %v495, %v578
    %v580 = vpop.f32.mrb[0].mxu0
    %581 = vmatprep.mubr.f32.mxu0 0.0
    %v582 = vand.u32 %v50, 4294901760
    %583 = vmatmul.mubr.f32.gmra.mrb[0].mxu0 %v582
    %v584 = vpop.f32.mrb[0].mxu0
    %v585 = vadd.f32 %v501, %v584
    %v586 = vpop.f32.mrb[0].mxu0
    %587 = vdwg.mxu0
    %v588 = vtanh.pop %v573
    %v589 = vtanh.pop %v579
    %v590 = vtanh.pop %v585
    %591 = vset.pattern.permute.xlu0 24
    %592 = vperm.xlu0 %591, %v26
    %v593 = vpop.permute.xlu0 %592
    %595 = vset.pattern.permute.xlu0 24
    %596 = vperm.xlu0 %595, %v27
    %v597 = vpop.permute.xlu0 %596
    %599 = vset.pattern.permute.xlu0 24
    %600 = vperm.xlu0 %599, %v28
    %v601 = vpop.permute.xlu0 %600
    %603 = vrot.lane.b32.xlu0 %v26, 124
    %v604 = vpop.permute.xlu0 %603
    %605 = vrot.lane.b32.xlu0 %v27, 124
    %v606 = vpop.permute.xlu0 %605
    %607 = vrot.lane.b32.xlu0 %v28, 124
    %v608 = vpop.permute.xlu0 %607
    %vm609 = vcmask 162816
    %v610 = vsel %vm609, %v604, 0
    %v612 = vsel %vm609, %v606, 0
    %v614 = vsel %vm609, %v608, 0
    %vm616 = vcmask 1043456
    %v618 = vsel %vm616, %v590, 0
    %620 = vmatprep.subr.mxu0 0.0
    %v621 = vand.u32 %v588, 4294901760
    %622 = vmatpush1.msra.mxu0 %v621
    %623 = vmatprep.subr.mxu0 0.0
    %v624 = vand.u32 %v589, 4294901760
    %625 = vmatpush1.msra.mxu0 %v624
    %626 = vmatprep.subr.mxu0 0.0
    %v627 = vand.u32 %v618, 4294901760
    %628 = vmatpush1.msra.mxu0 %v627
    %629 = vmatprep.subr.mxu0 0.0
    %630 = vmatpush1.msra.mxu0 0.0
    %631 = vmatprep.subr.mxu0 0.0
    %632 = vmatpush1.msra.mxu0 0.0
    %633 = vmatprep.subr.mxu0 0.0
    %634 = vmatpush1.msra.mxu0 0.0
    %635 = vmatprep.subr.mxu0 0.0
    %636 = vmatpush1.msra.mxu0 0.0
    %637 = vmatprep.subr.mxu0 0.0
    %638 = vmatpush1.msra.mxu0 0.0
    %639 = vmatprep.subr.mxu0 0.0
    %640 = vmatpush1.msra.mxu0 0.0
    %641 = vmatprep.subr.mxu0 0.0
    %642 = vmatpush1.msra.mxu0 0.0
    %643 = vmatprep.subr.mxu0 0.0
    %644 = vmatpush1.msra.mxu0 0.0
    %645 = vmatprep.subr.mxu0 0.0
    %646 = vmatpush1.msra.mxu0 0.0
    %647 = vmatprep.subr.mxu0 0.0
    %648 = vmatpush1.msra.mxu0 0.0
    %649 = vmatprep.subr.mxu0 0.0
    %650 = vmatpush1.msra.mxu0 0.0
    %651 = vmatprep.subr.mxu0 0.0
    %652 = vmatpush1.msra.mxu0 0.0
    %653 = vmatprep.subr.mxu0 0.0
    %654 = vmatpush1.msra.mxu0 0.0
    %655 = vmatprep.subr.mxu0 0.0
    %656 = vmatpush1.msra.mxu0 0.0
    %657 = vmatprep.subr.mxu0 0.0
    %658 = vmatpush1.msra.mxu0 0.0
    %659 = vmatprep.subr.mxu0 0.0
    %660 = vmatpush1.msra.mxu0 0.0
    %661 = vmatprep.subr.mxu0 0.0
    %662 = vmatpush1.msra.mxu0 0.0
    %663 = vmatprep.subr.mxu0 0.0
    %664 = vmatpush1.msra.mxu0 0.0
    %665 = vmatprep.subr.mxu0 0.0
    %666 = vmatpush1.msra.mxu0 0.0
    %667 = vmatprep.subr.mxu0 0.0
    %668 = vmatpush1.msra.mxu0 0.0
    %669 = vmatprep.subr.mxu0 0.0
    %670 = vmatpush1.msra.mxu0 0.0
    %671 = vmatprep.subr.mxu0 0.0
    %672 = vmatpush1.msra.mxu0 0.0
    %673 = vmatprep.subr.mxu0 0.0
    %674 = vmatpush1.msra.mxu0 0.0
    %675 = vmatprep.subr.mxu0 0.0
    %676 = vmatpush1.msra.mxu0 0.0
    %677 = vmatprep.subr.mxu0 0.0
    %678 = vmatpush1.msra.mxu0 0.0
    %679 = vmatprep.subr.mxu0 0.0
    %680 = vmatpush1.msra.mxu0 0.0
    %681 = vmatprep.subr.mxu0 0.0
    %682 = vmatpush1.msra.mxu0 0.0
    %683 = vmatprep.subr.mxu0 0.0
    %684 = vmatpush1.msra.mxu0 0.0
    %685 = vmatprep.subr.mxu0 0.0
    %686 = vmatpush1.msra.mxu0 0.0
    %687 = vmatprep.mubr.f32.mxu0 0.0
    %v688 = vand.u32 %v610, 4294901760
    %v689 = vsub.f32 %v610, %v688
    %v690 = vand.u32 %v689, 4294901760
    %v691 = vsub.f32 %v689, %v690
    %v692 = vand.u32 %v691, 4294901760
    %693 = vmatmul.mubr.f32.gmra.mrb[0].mxu0 %v692
    %v694 = vpop.f32.mrb[0].mxu0
    %v695 = vadd.f32 %v593, %v694
    %v696 = vpop.f32.mrb[0].mxu0
    %697 = vmatprep.mubr.f32.mxu0 0.0
    %v698 = vand.u32 %v612, 4294901760
    %v699 = vsub.f32 %v612, %v698
    %v700 = vand.u32 %v699, 4294901760
    %v701 = vsub.f32 %v699, %v700
    %v702 = vand.u32 %v701, 4294901760
    %703 = vmatmul.mubr.f32.gmra.mrb[0].mxu0 %v702
    %v704 = vpop.f32.mrb[0].mxu0
    %v705 = vadd.f32 %v597, %v704
    %v706 = vpop.f32.mrb[0].mxu0
    %707 = vmatprep.mubr.f32.mxu0 0.0
    %v708 = vand.u32 %v614, 4294901760
    %v709 = vsub.f32 %v614, %v708
    %v710 = vand.u32 %v709, 4294901760
    %v711 = vsub.f32 %v709, %v710
    %v712 = vand.u32 %v711, 4294901760
    %713 = vmatmul.mubr.f32.gmra.mrb[0].mxu0 %v712
    %v714 = vpop.f32.mrb[0].mxu0
    %v715 = vadd.f32 %v601, %v714
    %v716 = vpop.f32.mrb[0].mxu0
    %717 = vdwg.mxu0
    %718 = vmatprep.subr.mxu0 0.0
    %v719 = vand.u32 %v588, 4294901760
    %v720 = vsub.f32 %v588, %v719
    %v721 = vand.u32 %v720, 4294901760
    %v722 = vsub.f32 %v720, %v721
    %v723 = vand.u32 %v722, 4294901760
    %724 = vmatpush1.msra.mxu0 %v723
    %725 = vmatprep.subr.mxu0 0.0
    %v726 = vand.u32 %v589, 4294901760
    %v727 = vsub.f32 %v589, %v726
    %v728 = vand.u32 %v727, 4294901760
    %v729 = vsub.f32 %v727, %v728
    %v730 = vand.u32 %v729, 4294901760
    %731 = vmatpush1.msra.mxu0 %v730
    %732 = vmatprep.subr.mxu0 0.0
    %v733 = vand.u32 %v618, 4294901760
    %v734 = vsub.f32 %v618, %v733
    %v735 = vand.u32 %v734, 4294901760
    %v736 = vsub.f32 %v734, %v735
    %v737 = vand.u32 %v736, 4294901760
    %738 = vmatpush1.msra.mxu0 %v737
    %739 = vmatprep.subr.mxu0 0.0
    %740 = vmatpush1.msra.mxu0 0.0
    %741 = vmatprep.subr.mxu0 0.0
    %742 = vmatpush1.msra.mxu0 0.0
    %743 = vmatprep.subr.mxu0 0.0
    %744 = vmatpush1.msra.mxu0 0.0
    %745 = vmatprep.subr.mxu0 0.0
    %746 = vmatpush1.msra.mxu0 0.0
    %747 = vmatprep.subr.mxu0 0.0
    %748 = vmatpush1.msra.mxu0 0.0
    %749 = vmatprep.subr.mxu0 0.0
    %750 = vmatpush1.msra.mxu0 0.0
    %751 = vmatprep.subr.mxu0 0.0
    %752 = vmatpush1.msra.mxu0 0.0
    %753 = vmatprep.subr.mxu0 0.0
    %754 = vmatpush1.msra.mxu0 0.0
    %755 = vmatprep.subr.mxu0 0.0
    %756 = vmatpush1.msra.mxu0 0.0
    %757 = vmatprep.subr.mxu0 0.0
    %758 = vmatpush1.msra.mxu0 0.0
    %759 = vmatprep.subr.mxu0 0.0
    %760 = vmatpush1.msra.mxu0 0.0
    %761 = vmatprep.subr.mxu0 0.0
    %762 = vmatpush1.msra.mxu0 0.0
    %763 = vmatprep.subr.mxu0 0.0
    %764 = vmatpush1.msra.mxu0 0.0
    %765 = vmatprep.subr.mxu0 0.0
    %766 = vmatpush1.msra.mxu0 0.0
    %767 = vmatprep.subr.mxu0 0.0
    %768 = vmatpush1.msra.mxu0 0.0
    %769 = vmatprep.subr.mxu0 0.0
    %770 = vmatpush1.msra.mxu0 0.0
    %771 = vmatprep.subr.mxu0 0.0
    %772 = vmatpush1.msra.mxu0 0.0
    %773 = vmatprep.subr.mxu0 0.0
    %774 = vmatpush1.msra.mxu0 0.0
    %775 = vmatprep.subr.mxu0 0.0
    %776 = vmatpush1.msra.mxu0 0.0
    %777 = vmatprep.subr.mxu0 0.0
    %778 = vmatpush1.msra.mxu0 0.0
    %779 = vmatprep.subr.mxu0 0.0
    %780 = vmatpush1.msra.mxu0 0.0
    %781 = vmatprep.subr.mxu0 0.0
    %782 = vmatpush1.msra.mxu0 0.0
    %783 = vmatprep.subr.mxu0 0.0
    %784 = vmatpush1.msra.mxu0 0.0
    %785 = vmatprep.subr.mxu0 0.0
    %786 = vmatpush1.msra.mxu0 0.0
    %787 = vmatprep.subr.mxu0 0.0
    %788 = vmatpush1.msra.mxu0 0.0
    %789 = vmatprep.subr.mxu0 0.0
    %790 = vmatpush1.msra.mxu0 0.0
    %791 = vmatprep.subr.mxu0 0.0
    %792 = vmatpush1.msra.mxu0 0.0
    %793 = vmatprep.subr.mxu0 0.0
    %794 = vmatpush1.msra.mxu0 0.0
    %795 = vmatprep.subr.mxu0 0.0
    %796 = vmatpush1.msra.mxu0 0.0
    %797 = vmatprep.mubr.f32.mxu0 0.0
    %v798 = vand.u32 %v610, 4294901760
    %799 = vmatmul.mubr.f32.gmra.mrb[0].mxu0 %v798
    %v800 = vpop.f32.mrb[0].mxu0
    %v801 = vadd.f32 %v695, %v800
    %v802 = vpop.f32.mrb[0].mxu0
    %803 = vmatprep.mubr.f32.mxu0 0.0
    %v804 = vand.u32 %v612, 4294901760
    %805 = vmatmul.mubr.f32.gmra.mrb[0].mxu0 %v804
    %v806 = vpop.f32.mrb[0].mxu0
    %v807 = vadd.f32 %v705, %v806
    %v808 = vpop.f32.mrb[0].mxu0
    %809 = vmatprep.mubr.f32.mxu0 0.0
    %v810 = vand.u32 %v614, 4294901760
    %811 = vmatmul.mubr.f32.gmra.mrb[0].mxu0 %v810
    %v812 = vpop.f32.mrb[0].mxu0
    %v813 = vadd.f32 %v715, %v812
    %v814 = vpop.f32.mrb[0].mxu0
    %815 = vdwg.mxu0
    %816 = vmatprep.subr.mxu0 0.0
    %v817 = vand.u32 %v588, 4294901760
    %v818 = vsub.f32 %v588, %v817
    %819 = vmatpush1.msra.mxu0 %v818
    %820 = vmatprep.subr.mxu0 0.0
    %v821 = vand.u32 %v589, 4294901760
    %v822 = vsub.f32 %v589, %v821
    %823 = vmatpush1.msra.mxu0 %v822
    %824 = vmatprep.subr.mxu0 0.0
    %v825 = vand.u32 %v618, 4294901760
    %v826 = vsub.f32 %v618, %v825
    %827 = vmatpush1.msra.mxu0 %v826
    %828 = vmatprep.subr.mxu0 0.0
    %829 = vmatpush1.msra.mxu0 0.0
    %830 = vmatprep.subr.mxu0 0.0
    %831 = vmatpush1.msra.mxu0 0.0
    %832 = vmatprep.subr.mxu0 0.0
    %833 = vmatpush1.msra.mxu0 0.0
    %834 = vmatprep.subr.mxu0 0.0
    %835 = vmatpush1.msra.mxu0 0.0
    %836 = vmatprep.subr.mxu0 0.0
    %837 = vmatpush1.msra.mxu0 0.0
    %838 = vmatprep.subr.mxu0 0.0
    %839 = vmatpush1.msra.mxu0 0.0
    %840 = vmatprep.subr.mxu0 0.0
    %841 = vmatpush1.msra.mxu0 0.0
    %842 = vmatprep.subr.mxu0 0.0
    %843 = vmatpush1.msra.mxu0 0.0
    %844 = vmatprep.subr.mxu0 0.0
    %845 = vmatpush1.msra.mxu0 0.0
    %846 = vmatprep.subr.mxu0 0.0
    %847 = vmatpush1.msra.mxu0 0.0
    %848 = vmatprep.subr.mxu0 0.0
    %849 = vmatpush1.msra.mxu0 0.0
    %850 = vmatprep.subr.mxu0 0.0
    %851 = vmatpush1.msra.mxu0 0.0
    %852 = vmatprep.subr.mxu0 0.0
    %853 = vmatpush1.msra.mxu0 0.0
    %854 = vmatprep.subr.mxu0 0.0
    %855 = vmatpush1.msra.mxu0 0.0
    %856 = vmatprep.subr.mxu0 0.0
    %857 = vmatpush1.msra.mxu0 0.0
    %858 = vmatprep.subr.mxu0 0.0
    %859 = vmatpush1.msra.mxu0 0.0
    %860 = vmatprep.subr.mxu0 0.0
    %861 = vmatpush1.msra.mxu0 0.0
    %862 = vmatprep.subr.mxu0 0.0
    %863 = vmatpush1.msra.mxu0 0.0
    %864 = vmatprep.subr.mxu0 0.0
    %865 = vmatpush1.msra.mxu0 0.0
    %866 = vmatprep.subr.mxu0 0.0
    %867 = vmatpush1.msra.mxu0 0.0
    %868 = vmatprep.subr.mxu0 0.0
    %869 = vmatpush1.msra.mxu0 0.0
    %870 = vmatprep.subr.mxu0 0.0
    %871 = vmatpush1.msra.mxu0 0.0
    %872 = vmatprep.subr.mxu0 0.0
    %873 = vmatpush1.msra.mxu0 0.0
    %874 = vmatprep.subr.mxu0 0.0
    %875 = vmatpush1.msra.mxu0 0.0
    %876 = vmatprep.subr.mxu0 0.0
    %877 = vmatpush1.msra.mxu0 0.0
    %878 = vmatprep.subr.mxu0 0.0
    %879 = vmatpush1.msra.mxu0 0.0
    %880 = vmatprep.subr.mxu0 0.0
    %881 = vmatpush1.msra.mxu0 0.0
    %882 = vmatprep.subr.mxu0 0.0
    %883 = vmatpush1.msra.mxu0 0.0
    %884 = vmatprep.subr.mxu0 0.0
    %885 = vmatpush1.msra.mxu0 0.0
    %886 = vmatprep.mubr.f32.mxu0 0.0
    %v887 = vand.u32 %v610, 4294901760
    %v888 = vsub.f32 %v610, %v887
    %889 = vmatmul.mubr.f32.gmra.mrb[0].mxu0 %v888
    %v890 = vpop.f32.mrb[0].mxu0
    %v891 = vadd.f32 %v801, %v890
    %v892 = vpop.f32.mrb[0].mxu0
    %893 = vmatprep.mubr.f32.mxu0 0.0
    %v894 = vand.u32 %v612, 4294901760
    %v895 = vsub.f32 %v612, %v894
    %896 = vmatmul.mubr.f32.gmra.mrb[0].mxu0 %v895
    %v897 = vpop.f32.mrb[0].mxu0
    %v898 = vadd.f32 %v807, %v897
    %v899 = vpop.f32.mrb[0].mxu0
    %900 = vmatprep.mubr.f32.mxu0 0.0
    %v901 = vand.u32 %v614, 4294901760
    %v902 = vsub.f32 %v614, %v901
    %903 = vmatmul.mubr.f32.gmra.mrb[0].mxu0 %v902
    %v904 = vpop.f32.mrb[0].mxu0
    %v905 = vadd.f32 %v813, %v904
    %v906 = vpop.f32.mrb[0].mxu0
    %907 = vdwg.mxu0
    %908 = vmatprep.subr.mxu0 0.0
    %v909 = vand.u32 %v588, 4294901760
    %910 = vmatpush1.msra.mxu0 %v909
    %911 = vmatprep.subr.mxu0 0.0
    %v912 = vand.u32 %v589, 4294901760
    %913 = vmatpush1.msra.mxu0 %v912
    %914 = vmatprep.subr.mxu0 0.0
    %v915 = vand.u32 %v618, 4294901760
    %916 = vmatpush1.msra.mxu0 %v915
    %917 = vmatprep.subr.mxu0 0.0
    %918 = vmatpush1.msra.mxu0 0.0
    %919 = vmatprep.subr.mxu0 0.0
    %920 = vmatpush1.msra.mxu0 0.0
    %921 = vmatprep.subr.mxu0 0.0
    %922 = vmatpush1.msra.mxu0 0.0
    %923 = vmatprep.subr.mxu0 0.0
    %924 = vmatpush1.msra.mxu0 0.0
    %925 = vmatprep.subr.mxu0 0.0
    %926 = vmatpush1.msra.mxu0 0.0
    %927 = vmatprep.subr.mxu0 0.0
    %928 = vmatpush1.msra.mxu0 0.0
    %929 = vmatprep.subr.mxu0 0.0
    %930 = vmatpush1.msra.mxu0 0.0
    %931 = vmatprep.subr.mxu0 0.0
    %932 = vmatpush1.msra.mxu0 0.0
    %933 = vmatprep.subr.mxu0 0.0
    %934 = vmatpush1.msra.mxu0 0.0
    %935 = vmatprep.subr.mxu0 0.0
    %936 = vmatpush1.msra.mxu0 0.0
    %937 = vmatprep.subr.mxu0 0.0
    %938 = vmatpush1.msra.mxu0 0.0
    %939 = vmatprep.subr.mxu0 0.0
    %940 = vmatpush1.msra.mxu0 0.0
    %941 = vmatprep.subr.mxu0 0.0
    %942 = vmatpush1.msra.mxu0 0.0
    %943 = vmatprep.subr.mxu0 0.0
    %944 = vmatpush1.msra.mxu0 0.0
    %945 = vmatprep.subr.mxu0 0.0
    %946 = vmatpush1.msra.mxu0 0.0
    %947 = vmatprep.subr.mxu0 0.0
    %948 = vmatpush1.msra.mxu0 0.0
    %949 = vmatprep.subr.mxu0 0.0
    %950 = vmatpush1.msra.mxu0 0.0
    %951 = vmatprep.subr.mxu0 0.0
    %952 = vmatpush1.msra.mxu0 0.0
    %953 = vmatprep.subr.mxu0 0.0
    %954 = vmatpush1.msra.mxu0 0.0
    %955 = vmatprep.subr.mxu0 0.0
    %956 = vmatpush1.msra.mxu0 0.0
    %957 = vmatprep.subr.mxu0 0.0
    %958 = vmatpush1.msra.mxu0 0.0
    %959 = vmatprep.subr.mxu0 0.0
    %960 = vmatpush1.msra.mxu0 0.0
    %961 = vmatprep.subr.mxu0 0.0
    %962 = vmatpush1.msra.mxu0 0.0
    %963 = vmatprep.subr.mxu0 0.0
    %964 = vmatpush1.msra.mxu0 0.0
    %965 = vmatprep.subr.mxu0 0.0
    %966 = vmatpush1.msra.mxu0 0.0
    %967 = vmatprep.subr.mxu0 0.0
    %968 = vmatpush1.msra.mxu0 0.0
    %969 = vmatprep.subr.mxu0 0.0
    %970 = vmatpush1.msra.mxu0 0.0
    %971 = vmatprep.subr.mxu0 0.0
    %972 = vmatpush1.msra.mxu0 0.0
    %973 = vmatprep.subr.mxu0 0.0
    %974 = vmatpush1.msra.mxu0 0.0
    %975 = vmatprep.mubr.f32.mxu0 0.0
    %v976 = vand.u32 %v610, 4294901760
    %v977 = vsub.f32 %v610, %v976
    %v978 = vand.u32 %v977, 4294901760
    %979 = vmatmul.mubr.f32.gmra.mrb[0].mxu0 %v978
    %v980 = vpop.f32.mrb[0].mxu0
    %v981 = vadd.f32 %v891, %v980
    %v982 = vpop.f32.mrb[0].mxu0
    %983 = vmatprep.mubr.f32.mxu0 0.0
    %v984 = vand.u32 %v612, 4294901760
    %v985 = vsub.f32 %v612, %v984
    %v986 = vand.u32 %v985, 4294901760
    %987 = vmatmul.mubr.f32.gmra.mrb[0].mxu0 %v986
    %v988 = vpop.f32.mrb[0].mxu0
    %v989 = vadd.f32 %v898, %v988
    %v990 = vpop.f32.mrb[0].mxu0
    %991 = vmatprep.mubr.f32.mxu0 0.0
    %v992 = vand.u32 %v614, 4294901760
    %v993 = vsub.f32 %v614, %v992
    %v994 = vand.u32 %v993, 4294901760
    %995 = vmatmul.mubr.f32.gmra.mrb[0].mxu0 %v994
    %v996 = vpop.f32.mrb[0].mxu0
    %v997 = vadd.f32 %v905, %v996
    %v998 = vpop.f32.mrb[0].mxu0
    %999 = vdwg.mxu0
    %1000 = vmatprep.subr.mxu0 0.0
    %v1001 = vand.u32 %v588, 4294901760
    %v1002 = vsub.f32 %v588, %v1001
    %v1003 = vand.u32 %v1002, 4294901760
    %1004 = vmatpush1.msra.mxu0 %v1003
    %1005 = vmatprep.subr.mxu0 0.0
    %v1006 = vand.u32 %v589, 4294901760
    %v1007 = vsub.f32 %v589, %v1006
    %v1008 = vand.u32 %v1007, 4294901760
    %1009 = vmatpush1.msra.mxu0 %v1008
    %1010 = vmatprep.subr.mxu0 0.0
    %v1011 = vand.u32 %v618, 4294901760
    %v1012 = vsub.f32 %v618, %v1011
    %v1013 = vand.u32 %v1012, 4294901760
    %1014 = vmatpush1.msra.mxu0 %v1013
    %1015 = vmatprep.subr.mxu0 0.0
    %1016 = vmatpush1.msra.mxu0 0.0
    %1017 = vmatprep.subr.mxu0 0.0
    %1018 = vmatpush1.msra.mxu0 0.0
    %1019 = vmatprep.subr.mxu0 0.0
    %1020 = vmatpush1.msra.mxu0 0.0
    %1021 = vmatprep.subr.mxu0 0.0
    %1022 = vmatpush1.msra.mxu0 0.0
    %1023 = vmatprep.subr.mxu0 0.0
    %1024 = vmatpush1.msra.mxu0 0.0
    %1025 = vmatprep.subr.mxu0 0.0
    %1026 = vmatpush1.msra.mxu0 0.0
    %1027 = vmatprep.subr.mxu0 0.0
    %1028 = vmatpush1.msra.mxu0 0.0
    %1029 = vmatprep.subr.mxu0 0.0
    %1030 = vmatpush1.msra.mxu0 0.0
    %1031 = vmatprep.subr.mxu0 0.0
    %1032 = vmatpush1.msra.mxu0 0.0
    %1033 = vmatprep.subr.mxu0 0.0
    %1034 = vmatpush1.msra.mxu0 0.0
    %1035 = vmatprep.subr.mxu0 0.0
    %1036 = vmatpush1.msra.mxu0 0.0
    %1037 = vmatprep.subr.mxu0 0.0
    %1038 = vmatpush1.msra.mxu0 0.0
    %1039 = vmatprep.subr.mxu0 0.0
    %1040 = vmatpush1.msra.mxu0 0.0
    %1041 = vmatprep.subr.mxu0 0.0
    %1042 = vmatpush1.msra.mxu0 0.0
    %1043 = vmatprep.subr.mxu0 0.0
    %1044 = vmatpush1.msra.mxu0 0.0
    %1045 = vmatprep.subr.mxu0 0.0
    %1046 = vmatpush1.msra.mxu0 0.0
    %1047 = vmatprep.subr.mxu0 0.0
    %1048 = vmatpush1.msra.mxu0 0.0
    %1049 = vmatprep.subr.mxu0 0.0
    %1050 = vmatpush1.msra.mxu0 0.0
    %1051 = vmatprep.subr.mxu0 0.0
    %1052 = vmatpush1.msra.mxu0 0.0
    %1053 = vmatprep.subr.mxu0 0.0
    %1054 = vmatpush1.msra.mxu0 0.0
    %1055 = vmatprep.subr.mxu0 0.0
    %1056 = vmatpush1.msra.mxu0 0.0
    %1057 = vmatprep.subr.mxu0 0.0
    %1058 = vmatpush1.msra.mxu0 0.0
    %1059 = vmatprep.subr.mxu0 0.0
    %1060 = vmatpush1.msra.mxu0 0.0
    %1061 = vmatprep.subr.mxu0 0.0
    %1062 = vmatpush1.msra.mxu0 0.0
    %1063 = vmatprep.subr.mxu0 0.0
    %1064 = vmatpush1.msra.mxu0 0.0
    %1065 = vmatprep.subr.mxu0 0.0
    %1066 = vmatpush1.msra.mxu0 0.0
    %1067 = vmatprep.subr.mxu0 0.0
    %1068 = vmatpush1.msra.mxu0 0.0
    %1069 = vmatprep.subr.mxu0 0.0
    %1070 = vmatpush1.msra.mxu0 0.0
    %1071 = vmatprep.subr.mxu0 0.0
    %1072 = vmatpush1.msra.mxu0 0.0
    %1073 = vmatprep.mubr.f32.mxu0 0.0
    %v1074 = vand.u32 %v610, 4294901760
    %1075 = vmatmul.mubr.f32.gmra.mrb[0].mxu0 %v1074
    %v1076 = vpop.f32.mrb[0].mxu0
    %v1077 = vadd.f32 %v981, %v1076
    %v1078 = vpop.f32.mrb[0].mxu0
    %1079 = vmatprep.mubr.f32.mxu0 0.0
    %v1080 = vand.u32 %v612, 4294901760
    %1081 = vmatmul.mubr.f32.gmra.mrb[0].mxu0 %v1080
    %v1082 = vpop.f32.mrb[0].mxu0
    %v1083 = vadd.f32 %v989, %v1082
    %v1084 = vpop.f32.mrb[0].mxu0
    %1085 = vmatprep.mubr.f32.mxu0 0.0
    %v1086 = vand.u32 %v614, 4294901760
    %1087 = vmatmul.mubr.f32.gmra.mrb[0].mxu0 %v1086
    %v1088 = vpop.f32.mrb[0].mxu0
    %v1089 = vadd.f32 %v997, %v1088
    %v1090 = vpop.f32.mrb[0].mxu0
    %1091 = vdwg.mxu0
    %1092 = vmatprep.subr.mxu0 0.0
    %v1093 = vand.u32 %v588, 4294901760
    %1094 = vmatpush1.msra.mxu0 %v1093
    %1095 = vmatprep.subr.mxu0 0.0
    %v1096 = vand.u32 %v589, 4294901760
    %1097 = vmatpush1.msra.mxu0 %v1096
    %1098 = vmatprep.subr.mxu0 0.0
    %v1099 = vand.u32 %v618, 4294901760
    %1100 = vmatpush1.msra.mxu0 %v1099
    %1101 = vmatprep.subr.mxu0 0.0
    %1102 = vmatpush1.msra.mxu0 0.0
    %1103 = vmatprep.subr.mxu0 0.0
    %1104 = vmatpush1.msra.mxu0 0.0
    %1105 = vmatprep.subr.mxu0 0.0
    %1106 = vmatpush1.msra.mxu0 0.0
    %1107 = vmatprep.subr.mxu0 0.0
    %1108 = vmatpush1.msra.mxu0 0.0
    %1109 = vmatprep.subr.mxu0 0.0
    %1110 = vmatpush1.msra.mxu0 0.0
    %1111 = vmatprep.subr.mxu0 0.0
    %1112 = vmatpush1.msra.mxu0 0.0
    %1113 = vmatprep.subr.mxu0 0.0
    %1114 = vmatpush1.msra.mxu0 0.0
    %1115 = vmatprep.subr.mxu0 0.0
    %1116 = vmatpush1.msra.mxu0 0.0
    %1117 = vmatprep.subr.mxu0 0.0
    %1118 = vmatpush1.msra.mxu0 0.0
    %1119 = vmatprep.subr.mxu0 0.0
    %1120 = vmatpush1.msra.mxu0 0.0
    %1121 = vmatprep.subr.mxu0 0.0
    %1122 = vmatpush1.msra.mxu0 0.0
    %1123 = vmatprep.subr.mxu0 0.0
    %1124 = vmatpush1.msra.mxu0 0.0
    %1125 = vmatprep.subr.mxu0 0.0
    %1126 = vmatpush1.msra.mxu0 0.0
    %1127 = vmatprep.subr.mxu0 0.0
    %1128 = vmatpush1.msra.mxu0 0.0
    %1129 = vmatprep.subr.mxu0 0.0
    %1130 = vmatpush1.msra.mxu0 0.0
    %1131 = vmatprep.subr.mxu0 0.0
    %1132 = vmatpush1.msra.mxu0 0.0
    %1133 = vmatprep.subr.mxu0 0.0
    %1134 = vmatpush1.msra.mxu0 0.0
    %1135 = vmatprep.subr.mxu0 0.0
    %1136 = vmatpush1.msra.mxu0 0.0
    %1137 = vmatprep.subr.mxu0 0.0
    %1138 = vmatpush1.msra.mxu0 0.0
    %1139 = vmatprep.subr.mxu0 0.0
    %1140 = vmatpush1.msra.mxu0 0.0
    %1141 = vmatprep.subr.mxu0 0.0
    %1142 = vmatpush1.msra.mxu0 0.0
    %1143 = vmatprep.subr.mxu0 0.0
    %1144 = vmatpush1.msra.mxu0 0.0
    %1145 = vmatprep.subr.mxu0 0.0
    %1146 = vmatpush1.msra.mxu0 0.0
    %1147 = vmatprep.subr.mxu0 0.0
    %1148 = vmatpush1.msra.mxu0 0.0
    %1149 = vmatprep.subr.mxu0 0.0
    %1150 = vmatpush1.msra.mxu0 0.0
    %1151 = vmatprep.subr.mxu0 0.0
    %1152 = vmatpush1.msra.mxu0 0.0
    %1153 = vmatprep.subr.mxu0 0.0
    %1154 = vmatpush1.msra.mxu0 0.0
    %1155 = vmatprep.subr.mxu0 0.0
    %1156 = vmatpush1.msra.mxu0 0.0
    %1157 = vmatprep.subr.mxu0 0.0
    %1158 = vmatpush1.msra.mxu0 0.0
    %1159 = vmatprep.mubr.f32.mxu0 0.0
    %v1160 = vand.u32 %v610, 4294901760
    %1161 = vmatmul.mubr.f32.gmra.mrb[0].mxu0 %v1160
    %v1162 = vpop.f32.mrb[0].mxu0
    %v1163 = vadd.f32 %v1077, %v1162
    %v1164 = vpop.f32.mrb[0].mxu0
    %1165 = vmatprep.mubr.f32.mxu0 0.0
    %v1166 = vand.u32 %v612, 4294901760
    %1167 = vmatmul.mubr.f32.gmra.mrb[0].mxu0 %v1166
    %v1168 = vpop.f32.mrb[0].mxu0
    %v1169 = vadd.f32 %v1083, %v1168
    %v1170 = vpop.f32.mrb[0].mxu0
    %1171 = vmatprep.mubr.f32.mxu0 0.0
    %v1172 = vand.u32 %v614, 4294901760
    %1173 = vmatmul.mubr.f32.gmra.mrb[0].mxu0 %v1172
    %v1174 = vpop.f32.mrb[0].mxu0
    %v1175 = vadd.f32 %v1089, %v1174
    %v1176 = vpop.f32.mrb[0].mxu0
    %1177 = vdwg.mxu0
    %v1178 = vtanh.pop %v1163
    %v1179 = vtanh.pop %v1169
    %v1180 = vtanh.pop %v1175
    %1182 = vset.pattern.permute.xlu0 45
    %1183 = vperm.xlu0 %1182, %v29
    %v1184 = vpop.permute.xlu0 %1183
    %1186 = vrot.lane.b32.xlu0 %v29, 103
    %v1187 = vpop.permute.xlu0 %1186
    %v1188 = vsel %vm609, %v1187, 0
    %v1191 = vsel %vm616, %v1180, 0
    %1193 = vmatprep.subr.mxu0 0.0
    %v1194 = vand.u32 %v1178, 4294901760
    %1195 = vmatpush1.msra.mxu0 %v1194
    %1196 = vmatprep.subr.mxu0 0.0
    %v1197 = vand.u32 %v1179, 4294901760
    %1198 = vmatpush1.msra.mxu0 %v1197
    %1199 = vmatprep.subr.mxu0 0.0
    %v1200 = vand.u32 %v1191, 4294901760
    %1201 = vmatpush1.msra.mxu0 %v1200
    %1202 = vmatprep.subr.mxu0 0.0
    %1203 = vmatpush1.msra.mxu0 0.0
    %1204 = vmatprep.subr.mxu0 0.0
    %1205 = vmatpush1.msra.mxu0 0.0
    %1206 = vmatprep.subr.mxu0 0.0
    %1207 = vmatpush1.msra.mxu0 0.0
    %1208 = vmatprep.subr.mxu0 0.0
    %1209 = vmatpush1.msra.mxu0 0.0
    %1210 = vmatprep.subr.mxu0 0.0
    %1211 = vmatpush1.msra.mxu0 0.0
    %1212 = vmatprep.subr.mxu0 0.0
    %1213 = vmatpush1.msra.mxu0 0.0
    %1214 = vmatprep.subr.mxu0 0.0
    %1215 = vmatpush1.msra.mxu0 0.0
    %1216 = vmatprep.subr.mxu0 0.0
    %1217 = vmatpush1.msra.mxu0 0.0
    %1218 = vmatprep.subr.mxu0 0.0
    %1219 = vmatpush1.msra.mxu0 0.0
    %1220 = vmatprep.subr.mxu0 0.0
    %1221 = vmatpush1.msra.mxu0 0.0
    %1222 = vmatprep.subr.mxu0 0.0
    %1223 = vmatpush1.msra.mxu0 0.0
    %1224 = vmatprep.subr.mxu0 0.0
    %1225 = vmatpush1.msra.mxu0 0.0
    %1226 = vmatprep.subr.mxu0 0.0
    %1227 = vmatpush1.msra.mxu0 0.0
    %1228 = vmatprep.subr.mxu0 0.0
    %1229 = vmatpush1.msra.mxu0 0.0
    %1230 = vmatprep.subr.mxu0 0.0
    %1231 = vmatpush1.msra.mxu0 0.0
    %1232 = vmatprep.subr.mxu0 0.0
    %1233 = vmatpush1.msra.mxu0 0.0
    %1234 = vmatprep.subr.mxu0 0.0
    %1235 = vmatpush1.msra.mxu0 0.0
    %1236 = vmatprep.subr.mxu0 0.0
    %1237 = vmatpush1.msra.mxu0 0.0
    %1238 = vmatprep.subr.mxu0 0.0
    %1239 = vmatpush1.msra.mxu0 0.0
    %1240 = vmatprep.subr.mxu0 0.0
    %1241 = vmatpush1.msra.mxu0 0.0
    %1242 = vmatprep.subr.mxu0 0.0
    %1243 = vmatpush1.msra.mxu0 0.0
    %1244 = vmatprep.subr.mxu0 0.0
    %1245 = vmatpush1.msra.mxu0 0.0
    %1246 = vmatprep.subr.mxu0 0.0
    %1247 = vmatpush1.msra.mxu0 0.0
    %1248 = vmatprep.subr.mxu0 0.0
    %1249 = vmatpush1.msra.mxu0 0.0
    %1250 = vmatprep.subr.mxu0 0.0
    %1251 = vmatpush1.msra.mxu0 0.0
    %1252 = vmatprep.subr.mxu0 0.0
    %1253 = vmatpush1.msra.mxu0 0.0
    %1254 = vmatprep.subr.mxu0 0.0
    %1255 = vmatpush1.msra.mxu0 0.0
    %1256 = vmatprep.subr.mxu0 0.0
    %1257 = vmatpush1.msra.mxu0 0.0
    %1258 = vmatprep.subr.mxu0 0.0
    %1259 = vmatpush1.msra.mxu0 0.0
    %1260 = vmatprep.mubr.f32.mxu0 0.0
    %v1261 = vand.u32 %v1188, 4294901760
    %v1262 = vsub.f32 %v1188, %v1261
    %v1263 = vand.u32 %v1262, 4294901760
    %v1264 = vsub.f32 %v1262, %v1263
    %v1265 = vand.u32 %v1264, 4294901760
    %1266 = vmatmul.mubr.f32.gmra.mrb[0].mxu0 %v1265
    %v1267 = vpop.f32.mrb[0].mxu0
    %v1268 = vadd.f32 %v1184, %v1267
    %v1269 = vpop.f32.mrb[0].mxu0
    %1270 = vdwg.mxu0
    %1271 = vmatprep.subr.mxu0 0.0
    %v1272 = vand.u32 %v1178, 4294901760
    %v1273 = vsub.f32 %v1178, %v1272
    %v1274 = vand.u32 %v1273, 4294901760
    %v1275 = vsub.f32 %v1273, %v1274
    %v1276 = vand.u32 %v1275, 4294901760
    %1277 = vmatpush1.msra.mxu0 %v1276
    %1278 = vmatprep.subr.mxu0 0.0
    %v1279 = vand.u32 %v1179, 4294901760
    %v1280 = vsub.f32 %v1179, %v1279
    %v1281 = vand.u32 %v1280, 4294901760
    %v1282 = vsub.f32 %v1280, %v1281
    %v1283 = vand.u32 %v1282, 4294901760
    %1284 = vmatpush1.msra.mxu0 %v1283
    %1285 = vmatprep.subr.mxu0 0.0
    %v1286 = vand.u32 %v1191, 4294901760
    %v1287 = vsub.f32 %v1191, %v1286
    %v1288 = vand.u32 %v1287, 4294901760
    %v1289 = vsub.f32 %v1287, %v1288
    %v1290 = vand.u32 %v1289, 4294901760
    %1291 = vmatpush1.msra.mxu0 %v1290
    %1292 = vmatprep.subr.mxu0 0.0
    %1293 = vmatpush1.msra.mxu0 0.0
    %1294 = vmatprep.subr.mxu0 0.0
    %1295 = vmatpush1.msra.mxu0 0.0
    %1296 = vmatprep.subr.mxu0 0.0
    %1297 = vmatpush1.msra.mxu0 0.0
    %1298 = vmatprep.subr.mxu0 0.0
    %1299 = vmatpush1.msra.mxu0 0.0
    %1300 = vmatprep.subr.mxu0 0.0
    %1301 = vmatpush1.msra.mxu0 0.0
    %1302 = vmatprep.subr.mxu0 0.0
    %1303 = vmatpush1.msra.mxu0 0.0
    %1304 = vmatprep.subr.mxu0 0.0
    %1305 = vmatpush1.msra.mxu0 0.0
    %1306 = vmatprep.subr.mxu0 0.0
    %1307 = vmatpush1.msra.mxu0 0.0
    %1308 = vmatprep.subr.mxu0 0.0
    %1309 = vmatpush1.msra.mxu0 0.0
    %1310 = vmatprep.subr.mxu0 0.0
    %1311 = vmatpush1.msra.mxu0 0.0
    %1312 = vmatprep.subr.mxu0 0.0
    %1313 = vmatpush1.msra.mxu0 0.0
    %1314 = vmatprep.subr.mxu0 0.0
    %1315 = vmatpush1.msra.mxu0 0.0
    %1316 = vmatprep.subr.mxu0 0.0
    %1317 = vmatpush1.msra.mxu0 0.0
    %1318 = vmatprep.subr.mxu0 0.0
    %1319 = vmatpush1.msra.mxu0 0.0
    %1320 = vmatprep.subr.mxu0 0.0
    %1321 = vmatpush1.msra.mxu0 0.0
    %1322 = vmatprep.subr.mxu0 0.0
    %1323 = vmatpush1.msra.mxu0 0.0
    %1324 = vmatprep.subr.mxu0 0.0
    %1325 = vmatpush1.msra.mxu0 0.0
    %1326 = vmatprep.subr.mxu0 0.0
    %1327 = vmatpush1.msra.mxu0 0.0
    %1328 = vmatprep.subr.mxu0 0.0
    %1329 = vmatpush1.msra.mxu0 0.0
    %1330 = vmatprep.subr.mxu0 0.0
    %1331 = vmatpush1.msra.mxu0 0.0
    %1332 = vmatprep.subr.mxu0 0.0
    %1333 = vmatpush1.msra.mxu0 0.0
    %1334 = vmatprep.subr.mxu0 0.0
    %1335 = vmatpush1.msra.mxu0 0.0
    %1336 = vmatprep.subr.mxu0 0.0
    %1337 = vmatpush1.msra.mxu0 0.0
    %1338 = vmatprep.subr.mxu0 0.0
    %1339 = vmatpush1.msra.mxu0 0.0
    %1340 = vmatprep.subr.mxu0 0.0
    %1341 = vmatpush1.msra.mxu0 0.0
    %1342 = vmatprep.subr.mxu0 0.0
    %1343 = vmatpush1.msra.mxu0 0.0
    %1344 = vmatprep.subr.mxu0 0.0
    %1345 = vmatpush1.msra.mxu0 0.0
    %1346 = vmatprep.subr.mxu0 0.0
    %1347 = vmatpush1.msra.mxu0 0.0
    %1348 = vmatprep.subr.mxu0 0.0
    %1349 = vmatpush1.msra.mxu0 0.0
    %1350 = vmatprep.mubr.f32.mxu0 0.0
    %v1351 = vand.u32 %v1188, 4294901760
    %1352 = vmatmul.mubr.f32.gmra.mrb[0].mxu0 %v1351
    %v1353 = vpop.f32.mrb[0].mxu0
    %v1354 = vadd.f32 %v1268, %v1353
    %v1355 = vpop.f32.mrb[0].mxu0
    %1356 = vdwg.mxu0
    %1357 = vmatprep.subr.mxu0 0.0
    %v1358 = vand.u32 %v1178, 4294901760
    %v1359 = vsub.f32 %v1178, %v1358
    %1360 = vmatpush1.msra.mxu0 %v1359
    %1361 = vmatprep.subr.mxu0 0.0
    %v1362 = vand.u32 %v1179, 4294901760
    %v1363 = vsub.f32 %v1179, %v1362
    %1364 = vmatpush1.msra.mxu0 %v1363
    %1365 = vmatprep.subr.mxu0 0.0
    %v1366 = vand.u32 %v1191, 4294901760
    %v1367 = vsub.f32 %v1191, %v1366
    %1368 = vmatpush1.msra.mxu0 %v1367
    %1369 = vmatprep.subr.mxu0 0.0
    %1370 = vmatpush1.msra.mxu0 0.0
    %1371 = vmatprep.subr.mxu0 0.0
    %1372 = vmatpush1.msra.mxu0 0.0
    %1373 = vmatprep.subr.mxu0 0.0
    %1374 = vmatpush1.msra.mxu0 0.0
    %1375 = vmatprep.subr.mxu0 0.0
    %1376 = vmatpush1.msra.mxu0 0.0
    %1377 = vmatprep.subr.mxu0 0.0
    %1378 = vmatpush1.msra.mxu0 0.0
    %1379 = vmatprep.subr.mxu0 0.0
    %1380 = vmatpush1.msra.mxu0 0.0
    %1381 = vmatprep.subr.mxu0 0.0
    %1382 = vmatpush1.msra.mxu0 0.0
    %1383 = vmatprep.subr.mxu0 0.0
    %1384 = vmatpush1.msra.mxu0 0.0
    %1385 = vmatprep.subr.mxu0 0.0
    %1386 = vmatpush1.msra.mxu0 0.0
    %1387 = vmatprep.subr.mxu0 0.0
    %1388 = vmatpush1.msra.mxu0 0.0
    %1389 = vmatprep.subr.mxu0 0.0
    %1390 = vmatpush1.msra.mxu0 0.0
    %1391 = vmatprep.subr.mxu0 0.0
    %1392 = vmatpush1.msra.mxu0 0.0
    %1393 = vmatprep.subr.mxu0 0.0
    %1394 = vmatpush1.msra.mxu0 0.0
    %1395 = vmatprep.subr.mxu0 0.0
    %1396 = vmatpush1.msra.mxu0 0.0
    %1397 = vmatprep.subr.mxu0 0.0
    %1398 = vmatpush1.msra.mxu0 0.0
    %1399 = vmatprep.subr.mxu0 0.0
    %1400 = vmatpush1.msra.mxu0 0.0
    %1401 = vmatprep.subr.mxu0 0.0
    %1402 = vmatpush1.msra.mxu0 0.0
    %1403 = vmatprep.subr.mxu0 0.0
    %1404 = vmatpush1.msra.mxu0 0.0
    %1405 = vmatprep.subr.mxu0 0.0
    %1406 = vmatpush1.msra.mxu0 0.0
    %1407 = vmatprep.subr.mxu0 0.0
    %1408 = vmatpush1.msra.mxu0 0.0
    %1409 = vmatprep.subr.mxu0 0.0
    %1410 = vmatpush1.msra.mxu0 0.0
    %1411 = vmatprep.subr.mxu0 0.0
    %1412 = vmatpush1.msra.mxu0 0.0
    %1413 = vmatprep.subr.mxu0 0.0
    %1414 = vmatpush1.msra.mxu0 0.0
    %1415 = vmatprep.subr.mxu0 0.0
    %1416 = vmatpush1.msra.mxu0 0.0
    %1417 = vmatprep.subr.mxu0 0.0
    %1418 = vmatpush1.msra.mxu0 0.0
    %1419 = vmatprep.subr.mxu0 0.0
    %1420 = vmatpush1.msra.mxu0 0.0
    %1421 = vmatprep.subr.mxu0 0.0
    %1422 = vmatpush1.msra.mxu0 0.0
    %1423 = vmatprep.subr.mxu0 0.0
    %1424 = vmatpush1.msra.mxu0 0.0
    %1425 = vmatprep.subr.mxu0 0.0
    %1426 = vmatpush1.msra.mxu0 0.0
    %1427 = vmatprep.mubr.f32.mxu0 0.0
    %v1428 = vand.u32 %v1188, 4294901760
    %v1429 = vsub.f32 %v1188, %v1428
    %1430 = vmatmul.mubr.f32.gmra.mrb[0].mxu0 %v1429
    %v1431 = vpop.f32.mrb[0].mxu0
    %v1432 = vadd.f32 %v1354, %v1431
    %v1433 = vpop.f32.mrb[0].mxu0
    %1434 = vdwg.mxu0
    %1435 = vmatprep.subr.mxu0 0.0
    %v1436 = vand.u32 %v1178, 4294901760
    %1437 = vmatpush1.msra.mxu0 %v1436
    %1438 = vmatprep.subr.mxu0 0.0
    %v1439 = vand.u32 %v1179, 4294901760
    %1440 = vmatpush1.msra.mxu0 %v1439
    %1441 = vmatprep.subr.mxu0 0.0
    %v1442 = vand.u32 %v1191, 4294901760
    %1443 = vmatpush1.msra.mxu0 %v1442
    %1444 = vmatprep.subr.mxu0 0.0
    %1445 = vmatpush1.msra.mxu0 0.0
    %1446 = vmatprep.subr.mxu0 0.0
    %1447 = vmatpush1.msra.mxu0 0.0
    %1448 = vmatprep.subr.mxu0 0.0
    %1449 = vmatpush1.msra.mxu0 0.0
    %1450 = vmatprep.subr.mxu0 0.0
    %1451 = vmatpush1.msra.mxu0 0.0
    %1452 = vmatprep.subr.mxu0 0.0
    %1453 = vmatpush1.msra.mxu0 0.0
    %1454 = vmatprep.subr.mxu0 0.0
    %1455 = vmatpush1.msra.mxu0 0.0
    %1456 = vmatprep.subr.mxu0 0.0
    %1457 = vmatpush1.msra.mxu0 0.0
    %1458 = vmatprep.subr.mxu0 0.0
    %1459 = vmatpush1.msra.mxu0 0.0
    %1460 = vmatprep.subr.mxu0 0.0
    %1461 = vmatpush1.msra.mxu0 0.0
    %1462 = vmatprep.subr.mxu0 0.0
    %1463 = vmatpush1.msra.mxu0 0.0
    %1464 = vmatprep.subr.mxu0 0.0
    %1465 = vmatpush1.msra.mxu0 0.0
    %1466 = vmatprep.subr.mxu0 0.0
    %1467 = vmatpush1.msra.mxu0 0.0
    %1468 = vmatprep.subr.mxu0 0.0
    %1469 = vmatpush1.msra.mxu0 0.0
    %1470 = vmatprep.subr.mxu0 0.0
    %1471 = vmatpush1.msra.mxu0 0.0
    %1472 = vmatprep.subr.mxu0 0.0
    %1473 = vmatpush1.msra.mxu0 0.0
    %1474 = vmatprep.subr.mxu0 0.0
    %1475 = vmatpush1.msra.mxu0 0.0
    %1476 = vmatprep.subr.mxu0 0.0
    %1477 = vmatpush1.msra.mxu0 0.0
    %1478 = vmatprep.subr.mxu0 0.0
    %1479 = vmatpush1.msra.mxu0 0.0
    %1480 = vmatprep.subr.mxu0 0.0
    %1481 = vmatpush1.msra.mxu0 0.0
    %1482 = vmatprep.subr.mxu0 0.0
    %1483 = vmatpush1.msra.mxu0 0.0
    %1484 = vmatprep.subr.mxu0 0.0
    %1485 = vmatpush1.msra.mxu0 0.0
    %1486 = vmatprep.subr.mxu0 0.0
    %1487 = vmatpush1.msra.mxu0 0.0
    %1488 = vmatprep.subr.mxu0 0.0
    %1489 = vmatpush1.msra.mxu0 0.0
    %1490 = vmatprep.subr.mxu0 0.0
    %1491 = vmatpush1.msra.mxu0 0.0
    %1492 = vmatprep.subr.mxu0 0.0
    %1493 = vmatpush1.msra.mxu0 0.0
    %1494 = vmatprep.subr.mxu0 0.0
    %1495 = vmatpush1.msra.mxu0 0.0
    %1496 = vmatprep.subr.mxu0 0.0
    %1497 = vmatpush1.msra.mxu0 0.0
    %1498 = vmatprep.subr.mxu0 0.0
    %1499 = vmatpush1.msra.mxu0 0.0
    %1500 = vmatprep.subr.mxu0 0.0
    %1501 = vmatpush1.msra.mxu0 0.0
    %1502 = vmatprep.mubr.f32.mxu0 0.0
    %v1503 = vand.u32 %v1188, 4294901760
    %v1504 = vsub.f32 %v1188, %v1503
    %v1505 = vand.u32 %v1504, 4294901760
    %1506 = vmatmul.mubr.f32.gmra.mrb[0].mxu0 %v1505
    %v1507 = vpop.f32.mrb[0].mxu0
    %v1508 = vadd.f32 %v1432, %v1507
    %v1509 = vpop.f32.mrb[0].mxu0
    %1510 = vdwg.mxu0
    %1511 = vmatprep.subr.mxu0 0.0
    %v1512 = vand.u32 %v1178, 4294901760
    %v1513 = vsub.f32 %v1178, %v1512
    %v1514 = vand.u32 %v1513, 4294901760
    %1515 = vmatpush1.msra.mxu0 %v1514
    %1516 = vmatprep.subr.mxu0 0.0
    %v1517 = vand.u32 %v1179, 4294901760
    %v1518 = vsub.f32 %v1179, %v1517
    %v1519 = vand.u32 %v1518, 4294901760
    %1520 = vmatpush1.msra.mxu0 %v1519
    %1521 = vmatprep.subr.mxu0 0.0
    %v1522 = vand.u32 %v1191, 4294901760
    %v1523 = vsub.f32 %v1191, %v1522
    %v1524 = vand.u32 %v1523, 4294901760
    %1525 = vmatpush1.msra.mxu0 %v1524
    %1526 = vmatprep.subr.mxu0 0.0
    %1527 = vmatpush1.msra.mxu0 0.0
    %1528 = vmatprep.subr.mxu0 0.0
    %1529 = vmatpush1.msra.mxu0 0.0
    %1530 = vmatprep.subr.mxu0 0.0
    %1531 = vmatpush1.msra.mxu0 0.0
    %1532 = vmatprep.subr.mxu0 0.0
    %1533 = vmatpush1.msra.mxu0 0.0
    %1534 = vmatprep.subr.mxu0 0.0
    %1535 = vmatpush1.msra.mxu0 0.0
    %1536 = vmatprep.subr.mxu0 0.0
    %1537 = vmatpush1.msra.mxu0 0.0
    %1538 = vmatprep.subr.mxu0 0.0
    %1539 = vmatpush1.msra.mxu0 0.0
    %1540 = vmatprep.subr.mxu0 0.0
    %1541 = vmatpush1.msra.mxu0 0.0
    %1542 = vmatprep.subr.mxu0 0.0
    %1543 = vmatpush1.msra.mxu0 0.0
    %1544 = vmatprep.subr.mxu0 0.0
    %1545 = vmatpush1.msra.mxu0 0.0
    %1546 = vmatprep.subr.mxu0 0.0
    %1547 = vmatpush1.msra.mxu0 0.0
    %1548 = vmatprep.subr.mxu0 0.0
    %1549 = vmatpush1.msra.mxu0 0.0
    %1550 = vmatprep.subr.mxu0 0.0
    %1551 = vmatpush1.msra.mxu0 0.0
    %1552 = vmatprep.subr.mxu0 0.0
    %1553 = vmatpush1.msra.mxu0 0.0
    %1554 = vmatprep.subr.mxu0 0.0
    %1555 = vmatpush1.msra.mxu0 0.0
    %1556 = vmatprep.subr.mxu0 0.0
    %1557 = vmatpush1.msra.mxu0 0.0
    %1558 = vmatprep.subr.mxu0 0.0
    %1559 = vmatpush1.msra.mxu0 0.0
    %1560 = vmatprep.subr.mxu0 0.0
    %1561 = vmatpush1.msra.mxu0 0.0
    %1562 = vmatprep.subr.mxu0 0.0
    %1563 = vmatpush1.msra.mxu0 0.0
    %1564 = vmatprep.subr.mxu0 0.0
    %1565 = vmatpush1.msra.mxu0 0.0
    %1566 = vmatprep.subr.mxu0 0.0
    %1567 = vmatpush1.msra.mxu0 0.0
    %1568 = vmatprep.subr.mxu0 0.0
    %1569 = vmatpush1.msra.mxu0 0.0
    %1570 = vmatprep.subr.mxu0 0.0
    %1571 = vmatpush1.msra.mxu0 0.0
    %1572 = vmatprep.subr.mxu0 0.0
    %1573 = vmatpush1.msra.mxu0 0.0
    %1574 = vmatprep.subr.mxu0 0.0
    %1575 = vmatpush1.msra.mxu0 0.0
    %1576 = vmatprep.subr.mxu0 0.0
    %1577 = vmatpush1.msra.mxu0 0.0
    %1578 = vmatprep.subr.mxu0 0.0
    %1579 = vmatpush1.msra.mxu0 0.0
    %1580 = vmatprep.subr.mxu0 0.0
    %1581 = vmatpush1.msra.mxu0 0.0
    %1582 = vmatprep.subr.mxu0 0.0
    %1583 = vmatpush1.msra.mxu0 0.0
    %1584 = vmatprep.mubr.f32.mxu0 0.0
    %v1585 = vand.u32 %v1188, 4294901760
    %1586 = vmatmul.mubr.f32.gmra.mrb[0].mxu0 %v1585
    %v1587 = vpop.f32.mrb[0].mxu0
    %v1588 = vadd.f32 %v1508, %v1587
    %v1589 = vpop.f32.mrb[0].mxu0
    %1590 = vdwg.mxu0
    %1591 = vmatprep.subr.mxu0 0.0
    %v1592 = vand.u32 %v1178, 4294901760
    %1593 = vmatpush1.msra.mxu0 %v1592
    %1594 = vmatprep.subr.mxu0 0.0
    %v1595 = vand.u32 %v1179, 4294901760
    %1596 = vmatpush1.msra.mxu0 %v1595
    %1597 = vmatprep.subr.mxu0 0.0
    %v1598 = vand.u32 %v1191, 4294901760
    %1599 = vmatpush1.msra.mxu0 %v1598
    %1600 = vmatprep.subr.mxu0 0.0
    %1601 = vmatpush1.msra.mxu0 0.0
    %1602 = vmatprep.subr.mxu0 0.0
    %1603 = vmatpush1.msra.mxu0 0.0
    %1604 = vmatprep.subr.mxu0 0.0
    %1605 = vmatpush1.msra.mxu0 0.0
    %1606 = vmatprep.subr.mxu0 0.0
    %1607 = vmatpush1.msra.mxu0 0.0
    %1608 = vmatprep.subr.mxu0 0.0
    %1609 = vmatpush1.msra.mxu0 0.0
    %1610 = vmatprep.subr.mxu0 0.0
    %1611 = vmatpush1.msra.mxu0 0.0
    %1612 = vmatprep.subr.mxu0 0.0
    %1613 = vmatpush1.msra.mxu0 0.0
    %1614 = vmatprep.subr.mxu0 0.0
    %1615 = vmatpush1.msra.mxu0 0.0
    %1616 = vmatprep.subr.mxu0 0.0
    %1617 = vmatpush1.msra.mxu0 0.0
    %1618 = vmatprep.subr.mxu0 0.0
    %1619 = vmatpush1.msra.mxu0 0.0
    %1620 = vmatprep.subr.mxu0 0.0
    %1621 = vmatpush1.msra.mxu0 0.0
    %1622 = vmatprep.subr.mxu0 0.0
    %1623 = vmatpush1.msra.mxu0 0.0
    %1624 = vmatprep.subr.mxu0 0.0
    %1625 = vmatpush1.msra.mxu0 0.0
    %1626 = vmatprep.subr.mxu0 0.0
    %1627 = vmatpush1.msra.mxu0 0.0
    %1628 = vmatprep.subr.mxu0 0.0
    %1629 = vmatpush1.msra.mxu0 0.0
    %1630 = vmatprep.subr.mxu0 0.0
    %1631 = vmatpush1.msra.mxu0 0.0
    %1632 = vmatprep.subr.mxu0 0.0
    %1633 = vmatpush1.msra.mxu0 0.0
    %1634 = vmatprep.subr.mxu0 0.0
    %1635 = vmatpush1.msra.mxu0 0.0
    %1636 = vmatprep.subr.mxu0 0.0
    %1637 = vmatpush1.msra.mxu0 0.0
    %1638 = vmatprep.subr.mxu0 0.0
    %1639 = vmatpush1.msra.mxu0 0.0
    %1640 = vmatprep.subr.mxu0 0.0
    %1641 = vmatpush1.msra.mxu0 0.0
    %1642 = vmatprep.subr.mxu0 0.0
    %1643 = vmatpush1.msra.mxu0 0.0
    %1644 = vmatprep.subr.mxu0 0.0
    %1645 = vmatpush1.msra.mxu0 0.0
    %1646 = vmatprep.subr.mxu0 0.0
    %1647 = vmatpush1.msra.mxu0 0.0
    %1648 = vmatprep.subr.mxu0 0.0
    %1649 = vmatpush1.msra.mxu0 0.0
    %1650 = vmatprep.subr.mxu0 0.0
    %1651 = vmatpush1.msra.mxu0 0.0
    %1652 = vmatprep.subr.mxu0 0.0
    %1653 = vmatpush1.msra.mxu0 0.0
    %1654 = vmatprep.subr.mxu0 0.0
    %1655 = vmatpush1.msra.mxu0 0.0
    %1656 = vmatprep.subr.mxu0 0.0
    %1657 = vmatpush1.msra.mxu0 0.0
    %1658 = vmatprep.mubr.f32.mxu0 0.0
    %v1659 = vand.u32 %v1188, 4294901760
    %1660 = vmatmul.mubr.f32.gmra.mrb[0].mxu0 %v1659
    %v1661 = vpop.f32.mrb[0].mxu0
    %v1662 = vadd.f32 %v1588, %v1661
    %v1663 = vpop.f32.mrb[0].mxu0
    %1664 = vdwg.mxu0
    %1665 = vst [vmem:[%s2] sm:$0x7] %v1662
    // Predicated region
    $region14: #{fwd.1} parent=1 // pred_check
      _
    $region15: #{fwd.1} parent=1 // pred_check_branch
      %1667 = sbr.rel (0) target = $region17
    $region16: #{fwd.1} parent=1 // pred_region
      _
    $region17: #{fwd.1} parent=1 // pred_fallthru
      _
    // Predicated region
    $region18: #{fwd.1} parent=1 // pred_check
      _
    $region19: #{fwd.1} parent=1 // pred_check_branch
      %1669 = sbr.rel (0) target = $region21
    $region20: #{fwd.1} parent=1 // pred_region
      _
    $region21: #{fwd.1} parent=1 // pred_fallthru
      _
    %1670 = vsyncpa [#allocation3], 1

</llo_original>
